<compile_context>
chip_gen: v5e
topology: v5e:2x2
jax: 0.10.0
libtpu: 0.0.40
codegen_flags: <defaults>
</compile_context>

<pallas_src>
import functools

import numpy as np
import jax
import jax.numpy as jnp
from jax.experimental import pallas as pl
from jax.experimental.pallas import tpu as pltpu


_COMPUTE_DTYPE = jnp.bfloat16   # MXU-native compute dtype; accumulation stays f32.


# --------------------------------------------------------------------------
# Bilinear (align_corners=False) resize expressed as a dense matrix.
# Cached: built once per shape tuple, at trace time under jit (baked constant).
# --------------------------------------------------------------------------
@functools.lru_cache(maxsize=None)
def _bilinear_matrix(out_size: int, in_size: int) -> np.ndarray:
    """M (out, in) with M @ v == F.interpolate(v, bilinear, align_corners=False)."""
    dst = np.arange(out_size, dtype=np.float64)
    scale = in_size / out_size
    src = (dst + 0.5) * scale - 0.5
    src = np.maximum(src, 0.0)                      # PyTorch clamps negatives to 0
    i0 = np.minimum(np.floor(src).astype(np.int64), in_size - 1)
    i1 = np.minimum(i0 + 1, in_size - 1)
    frac = src - i0
    M = np.zeros((out_size, in_size), dtype=np.float64)
    rows = np.arange(out_size)
    np.add.at(M, (rows, i0), 1.0 - frac)
    np.add.at(M, (rows, i1), frac)
    return M.astype(np.float32)


@functools.lru_cache(maxsize=None)
def _resize_matrix(out_hw, in_hw) -> np.ndarray:
    """Separable bilinear resize folded into one (Ho*Wo, Hi*Wi) matrix."""
    Mh = _bilinear_matrix(out_hw[0], in_hw[0])
    Mw = _bilinear_matrix(out_hw[1], in_hw[1])
    R = np.einsum("hH,wW->hwHW", Mh, Mw).reshape(
        out_hw[0] * out_hw[1], in_hw[0] * in_hw[1]
    )
    return R.astype(np.float32)


@functools.lru_cache(maxsize=None)
def _block_diag_resize_matrix(b: int, out_hw, in_hw) -> np.ndarray:
    """Block-diagonal resize for a static batch block: b images -> one 2-D dot."""
    R = _resize_matrix(out_hw, in_hw)                      # (P_out, P_in)
    return np.kron(np.eye(b, dtype=np.float32), R)         # (b*P_out, b*P_in)


# --------------------------------------------------------------------------
# Pallas kernel: one grid step == one block of `b` batch images, fully fused.
# Five plain 2-D MXU dots, f32 accumulation, no per-image loop, no hoisting.
# --------------------------------------------------------------------------
def aux_x_kernel(x1_ref, x2_ref, x3_ref,
                 w1_ref, w2_ref, w3_ref,
                 r1_ref, r3_ref, out_ref):
    f32 = jnp.float32
    cdt = w1_ref.dtype                       # bf16 compute dtype
    b, P2, Cm = out_ref.shape
    _, P1, C1 = x1_ref.shape
    _, _, C2 = x2_ref.shape
    _, P3, C3 = x3_ref.shape

    # Branch 2: conv only (already at target resolution). M = b*P2, K = C2, N = Cm.
    acc = jnp.dot(x2_ref[...].reshape(b * P2, C2), w2_ref[...],
                  preferred_element_type=f32)                          # (b*P2, Cm)

    # Branch 1: resize FIRST (C1 < Cm) via block-diag resize matrix, then the
    # wf-folded conv.  M = b*P2, K = b*P1 / C1, N = C1 / Cm.
    z1 = jnp.dot(r1_ref[...], x1_ref[...].reshape(b * P1, C1),
                 preferred_element_type=f32).astype(cdt)               # (b*P2, C1)
    acc = acc + jnp.dot(z1, w1_ref[...], preferred_element_type=f32)   # (b*P2, Cm)

    # Branch 3: conv FIRST (C3 > Cm), then block-diag resize.
    # M = b*P3 / b*P2, K = C3 / b*P3, N = Cm.
    y3 = jnp.dot(x3_ref[...].reshape(b * P3, C3), w3_ref[...],
                 preferred_element_type=f32).astype(cdt)               # (b*P3, Cm)
    acc = acc + jnp.dot(r3_ref[...], y3, preferred_element_type=f32)   # (b*P2, Cm)

    out_ref[...] = acc.reshape(b, P2, Cm).astype(out_ref.dtype)


# --------------------------------------------------------------------------
# Wrappers.
# --------------------------------------------------------------------------
def _cores_per_chip() -> int:
    """TensorCores addressable by one pallas_call (megacore / v7x dual-TC)."""
    try:
        kind = jax.devices()[0].device_kind.lower()
    except Exception:
        return 1
    if "v7" in kind:
        return 2
    if "v4" in kind and "lite" not in kind:   # v4 megacore
        return 2
    return 1                                  # v5e / v6e: single TC per device


def _pick_batch_block(n: int, cores_per_chip: int | None = None) -> int:
    """Largest batch block (<=8, bounds the block-diag resize matrix) dividing n.

    On single-TC chips we prefer a single grid step (per-step overhead ~0.35us
    dominates this tiny workload); on multi-TC chips we keep >= cores parallel
    steps so every TensorCore gets work.
    """
    if cores_per_chip is None:
        cores_per_chip = _cores_per_chip()
    candidates = [b for b in (8, 4, 2, 1) if n % b == 0]
    if cores_per_chip > 1:
        for b in candidates:
            if n // b >= cores_per_chip:
                return b
    return candidates[0]


def fuse_params(params, compute_dtype=_COMPUTE_DTYPE):
    """Fold the final 1x1 conv into the three branch weights (done once)."""
    w1, w2, w3, wf = (jnp.asarray(w, jnp.float32) for w in params)
    Cm = w1.shape[1]
    w1f = (w1 @ wf[0 * Cm:1 * Cm]).astype(compute_dtype)   # (C1, Cm)
    w2f = (w2 @ wf[1 * Cm:2 * Cm]).astype(compute_dtype)   # (C2, Cm)
    w3f = (w3 @ wf[2 * Cm:3 * Cm]).astype(compute_dtype)   # (C3, Cm)
    return (w1f, w2f, w3f)


@functools.partial(jax.jit, static_argnames=("batch_block", "out_dtype"))
def _aux_x_nhwc(x1, x2, x3, w1f, w2f, w3f, *, batch_block, out_dtype=jnp.float32):
    N, H1, W1, C1 = x1.shape
    _, H2, W2, C2 = x2.shape
    _, H3, W3, C3 = x3.shape
    Cm = w1f.shape[1]
    b = batch_block
    assert N % b == 0, (N, b)
    P1, P2, P3 = H1 * W1, H2 * W2, H3 * W3

    # Trace-time constants (cached numpy construction, no per-call host work).
    # NOTE: bf16 is exact for these power-of-two resize ratios; keep f32 for
    # non-power-of-two ratios (the matrices are tiny).
    r1 = jnp.asarray(_block_diag_resize_matrix(b, (H2, W2), (H1, W1)), _COMPUTE_DTYPE)
    r3 = jnp.asarray(_block_diag_resize_matrix(b, (H2, W2), (H3, W3)), _COMPUTE_DTYPE)

    # TODO(synk): switch to a separable (rows-then-columns) resize once the dense
    # block-diag matrices approach a few MiB — they are the only O(H^2*W^2) term
    # and the first thing to blow v7x's 64 MiB VMEM at large resolutions.
    resize_bytes = 2 * (r1.size + r3.size)
    vmem_limit = int(96 * 2**20) if resize_bytes > (8 * 2**20) else None

    x1 = x1.astype(_COMPUTE_DTYPE).reshape(N, P1, C1)
    x2 = x2.astype(_COMPUTE_DTYPE).reshape(N, P2, C2)
    x3 = x3.astype(_COMPUTE_DTYPE).reshape(N, P3, C3)

    out = pl.pallas_call(
        aux_x_kernel,
        out_shape=jax.ShapeDtypeStruct((N, P2, Cm), out_dtype),
        grid=(N // b,),
        in_specs=[
            pl.BlockSpec((b, P1, C1), lambda n: (n, 0, 0)),
            pl.BlockSpec((b, P2, C2), lambda n: (n, 0, 0)),
            pl.BlockSpec((b, P3, C3), lambda n: (n, 0, 0)),
            pl.BlockSpec((C1, Cm), lambda n: (0, 0)),          # weights: resident
            pl.BlockSpec((C2, Cm), lambda n: (0, 0)),
            pl.BlockSpec((C3, Cm), lambda n: (0, 0)),
            pl.BlockSpec((b * P2, b * P1), lambda n: (0, 0)),  # resize: resident
            pl.BlockSpec((b * P2, b * P3), lambda n: (0, 0)),
        ],
        out_specs=pl.BlockSpec((b, P2, Cm), lambda n: (n, 0, 0)),
        compiler_params=pltpu.CompilerParams(
            dimension_semantics=("parallel",),
            vmem_limit_bytes=vmem_limit),
    )(x1, x2, x3, w1f, w2f, w3f, r1, r3)
    return out.reshape(N, H2, W2, Cm)


def aux_x_forward_nhwc(x1, x2, x3, fused_params, batch_block=None,
                       out_dtype=jnp.float32):
    """Preferred (hot-path) entry point: NHWC in, NHWC out."""
    w1f, w2f, w3f = fused_params
    if batch_block is None:
        batch_block = _pick_batch_block(x1.shape[0])
    return _aux_x_nhwc(x1, x2, x3, w1f, w2f, w3f,
                       batch_block=batch_block, out_dtype=out_dtype)


@functools.partial(jax.jit, static_argnames=("batch_block", "out_dtype"))
def _aux_x_nchw(x1, x2, x3, w1f, w2f, w3f, *, batch_block, out_dtype=jnp.float32):
    # PyTorch-layout parity wrapper; transposes stay under the same jit so XLA
    # fuses them at the pallas_call boundary.
    # TODO(synk): an NCHW-native kernel variant (transposed dots, NCHW output
    # written directly) would remove these four layout round-trips entirely.
    out = _aux_x_nhwc(
        jnp.transpose(x1, (0, 2, 3, 1)),
        jnp.transpose(x2, (0, 2, 3, 1)),
        jnp.transpose(x3, (0, 2, 3, 1)),
        w1f, w2f, w3f, batch_block=batch_block, out_dtype=out_dtype)
    return jnp.transpose(out, (0, 3, 1, 2))


def aux_x_forward_nchw(x1, x2, x3, fused_params, batch_block=None,
                       out_dtype=jnp.float32):
    """PyTorch-layout parity wrapper (NCHW in / NCHW out)."""
    w1f, w2f, w3f = fused_params
    if batch_block is None:
        batch_block = _pick_batch_block(x1.shape[0])
    return _aux_x_nchw(x1, x2, x3, w1f, w2f, w3f,
                       batch_block=batch_block, out_dtype=out_dtype)


# --------------------------------------------------------------------------
# Pure-JAX f32 reference with the ORIGINAL op order (unfused weights,
# conv-then-resize, lane concat) used as the correctness check.
# --------------------------------------------------------------------------
def aux_x_reference(x1_nchw, x2_nchw, x3_nchw, params):
    w1, w2, w3, wf = params
    x1 = jnp.transpose(x1_nchw, (0, 2, 3, 1)).astype(jnp.float32)
    x2 = jnp.transpose(x2_nchw, (0, 2, 3, 1)).astype(jnp.float32)
    x3 = jnp.transpose(x3_nchw, (0, 2, 3, 1)).astype(jnp.float32)
    N, H1, W1, _ = x1.shape
    _, H2, W2, _ = x2.shape
    _, H3, W3, _ = x3.shape
    Cm = w1.shape[1]
    r1 = jnp.asarray(_resize_matrix((H2, W2), (H1, W1)))
    r3 = jnp.asarray(_resize_matrix((H2, W2), (H3, W3)))

    y1 = jnp.einsum("nhwc,cd->nhwd", x1, w1).reshape(N, H1 * W1, Cm)
    z1 = jnp.einsum("pq,nqd->npd", r1, y1)
    y2 = jnp.einsum("nhwc,cd->nhwd", x2, w2).reshape(N, H2 * W2, Cm)
    y3 = jnp.einsum("nhwc,cd->nhwd", x3, w3).reshape(N, H3 * W3, Cm)
    z3 = jnp.einsum("pq,nqd->npd", r3, y3)
    cat = jnp.concatenate([z1, y2, z3], axis=-1)
    out = jnp.einsum("npc,cd->npd", cat, wf).reshape(N, H2, W2, Cm)
    return jnp.transpose(out, (0, 3, 1, 2))


# --------------------------------------------------------------------------
def _init_params(key, in_features=(64, 128, 320)):
    c1, c2, c3 = in_features
    cm = c2
    ks = jax.random.split(key, 4)

    def kaiming(k, cin, cout):
        # deterministic synthetic init, matmul layout (Cin, Cout)
        return (jax.random.normal(k, (cin, cout), dtype=jnp.float32)
                * np.sqrt(2.0 / cin)).astype(jnp.float32)

    w1 = kaiming(ks[0], c1, cm)
    w2 = kaiming(ks[1], c2, cm)
    w3 = kaiming(ks[2], c3, cm)
    wf = kaiming(ks[3], 3 * cm, cm)
    return (w1, w2, w3, wf)


if __name__ == "__main__":
    key = jax.random.PRNGKey(0)
    k1, k2, k3, kp = jax.random.split(key, 4)

    # Feature-pyramid shapes consistent with the module (NCHW, PyTorch-style):
    # x1: stage-1 (64 ch, 16x16), x2: stage-2 (128 ch, 8x8), x3: stage-3 (320 ch, 4x4)
    N = 4
    x1 = jax.random.normal(k1, (N, 64, 16, 16), dtype=jnp.float32)
    x2 = jax.random.normal(k2, (N, 128, 8, 8), dtype=jnp.float32)
    x3 = jax.random.normal(k3, (N, 320, 4, 4), dtype=jnp.float32)

    params = _init_params(kp, in_features=(64, 128, 320))
    fused = fuse_params(params)

    # Generation-aware batch block: grid of 1 step on v5e/v6e, >=2 parallel
    # steps on multi-TensorCore chips (v4 megacore / v7x).
    out = aux_x_forward_nchw(x1, x2, x3, fused)
    out = jax.block_until_ready(out)
    assert out.shape == (N, 128, 8, 8), out.shape

    ref = jax.block_until_ready(aux_x_reference(x1, x2, x3, params))

    # bf16 MXU compute + algebraic refactor (weight folding, resize-first) ->
    # validate with bf16-appropriate tolerances against the f32 reference.
    out_np = np.asarray(out, dtype=np.float64)
    ref_np = np.asarray(ref, dtype=np.float64)
    rel_l2 = np.linalg.norm(out_np - ref_np) / np.linalg.norm(ref_np)
    assert rel_l2 < 3e-2, f"relative L2 error too large: {rel_l2}"
    np.testing.assert_allclose(out_np, ref_np, rtol=1e-1, atol=1e-1)

    print("KERNEL_OK")
</pallas_src>

<mosaic_0001>
module attributes {stable_mosaic.version = 11 : i64} {
  func.func @aux_x_kernel(%arg0: i32, %arg1: memref<4x256x64xbf16, #tpu.memory_space<vmem>>, %arg2: memref<4x64x128xbf16, #tpu.memory_space<vmem>>, %arg3: memref<4x16x320xbf16, #tpu.memory_space<vmem>>, %arg4: memref<64x128xbf16, #tpu.memory_space<vmem>>, %arg5: memref<128x128xbf16, #tpu.memory_space<vmem>>, %arg6: memref<320x128xbf16, #tpu.memory_space<vmem>>, %arg7: memref<256x1024xbf16, #tpu.memory_space<vmem>>, %arg8: memref<256x64xbf16, #tpu.memory_space<vmem>>, %arg9: memref<4x64x128xf32, #tpu.memory_space<vmem>>) attributes {dimension_semantics = [#tpu.dimension_semantics<parallel>], iteration_bounds = array<i64: 1>, scalar_prefetch = 0 : i64, scratch_operands = 0 : i64, tpu.core_type = #tpu.core_type<tc>, window_params = [{transform_indices = @transform_0, window_bounds = array<i64: 4, 256, 64>}, {transform_indices = @transform_1, window_bounds = array<i64: 4, 64, 128>}, {transform_indices = @transform_2, window_bounds = array<i64: 4, 16, 320>}, {pipeline_mode = #tpu.pipeline_mode<synchronous>, transform_indices = @transform_3, window_bounds = array<i64: 64, 128>}, {pipeline_mode = #tpu.pipeline_mode<synchronous>, transform_indices = @transform_4, window_bounds = array<i64: 128, 128>}, {pipeline_mode = #tpu.pipeline_mode<synchronous>, transform_indices = @transform_5, window_bounds = array<i64: 320, 128>}, {pipeline_mode = #tpu.pipeline_mode<synchronous>, transform_indices = @transform_6, window_bounds = array<i64: 256, 1024>}, {pipeline_mode = #tpu.pipeline_mode<synchronous>, transform_indices = @transform_7, window_bounds = array<i64: 256, 64>}, {transform_indices = @transform_8, window_bounds = array<i64: 4, 64, 128>}]} {
    %c0 = arith.constant 0 : index
    %c0_0 = arith.constant 0 : index
    %c0_1 = arith.constant 0 : index
    %0 = vector.load %arg2[%c0, %c0_0, %c0_1] : memref<4x64x128xbf16, #tpu.memory_space<vmem>>, vector<4x64x128xbf16>
    %1 = vector.shape_cast %0 : vector<4x64x128xbf16> to vector<256x128xbf16>
    %c0_2 = arith.constant 0 : index
    %c0_3 = arith.constant 0 : index
    %2 = vector.load %arg5[%c0_2, %c0_3] : memref<128x128xbf16, #tpu.memory_space<vmem>>, vector<128x128xbf16>
    %cst = arith.constant dense<0.000000e+00> : vector<256x128xf32>
    %3 = tpu.matmul %1, %2, %cst {dimension_numbers = #tpu.dot_dimension_numbers<[1], [0], [0], [1], [0, 0, 1, 1], [], []>} : vector<256x128xbf16>, vector<128x128xbf16>, vector<256x128xf32> -> vector<256x128xf32>
    %c0_4 = arith.constant 0 : index
    %c0_5 = arith.constant 0 : index
    %4 = vector.load %arg7[%c0_4, %c0_5] : memref<256x1024xbf16, #tpu.memory_space<vmem>>, vector<256x1024xbf16>
    %c0_6 = arith.constant 0 : index
    %c0_7 = arith.constant 0 : index
    %c0_8 = arith.constant 0 : index
    %5 = vector.load %arg1[%c0_6, %c0_7, %c0_8] : memref<4x256x64xbf16, #tpu.memory_space<vmem>>, vector<4x256x64xbf16>
    %6 = vector.shape_cast %5 : vector<4x256x64xbf16> to vector<1024x64xbf16>
    %cst_9 = arith.constant dense<0.000000e+00> : vector<256x64xf32>
    %7 = tpu.matmul %4, %6, %cst_9 {dimension_numbers = #tpu.dot_dimension_numbers<[1], [0], [0], [1], [0, 0, 1, 1], [], []>} : vector<256x1024xbf16>, vector<1024x64xbf16>, vector<256x64xf32> -> vector<256x64xf32>
    %8 = arith.truncf %7 : vector<256x64xf32> to vector<256x64xbf16>
    %c0_10 = arith.constant 0 : index
    %c0_11 = arith.constant 0 : index
    %9 = vector.load %arg4[%c0_10, %c0_11] : memref<64x128xbf16, #tpu.memory_space<vmem>>, vector<64x128xbf16>
    %cst_12 = arith.constant dense<0.000000e+00> : vector<256x128xf32>
    %10 = tpu.matmul %8, %9, %cst_12 {dimension_numbers = #tpu.dot_dimension_numbers<[1], [0], [0], [1], [0, 0, 1, 1], [], []>} : vector<256x64xbf16>, vector<64x128xbf16>, vector<256x128xf32> -> vector<256x128xf32>
    %11 = arith.addf %3, %10 : vector<256x128xf32>
    %c0_13 = arith.constant 0 : index
    %c0_14 = arith.constant 0 : index
    %c0_15 = arith.constant 0 : index
    %12 = vector.load %arg3[%c0_13, %c0_14, %c0_15] : memref<4x16x320xbf16, #tpu.memory_space<vmem>>, vector<4x16x320xbf16>
    %13 = vector.shape_cast %12 : vector<4x16x320xbf16> to vector<64x320xbf16>
    %c0_16 = arith.constant 0 : index
    %c0_17 = arith.constant 0 : index
    %14 = vector.load %arg6[%c0_16, %c0_17] : memref<320x128xbf16, #tpu.memory_space<vmem>>, vector<320x128xbf16>
    %cst_18 = arith.constant dense<0.000000e+00> : vector<64x128xf32>
    %15 = tpu.matmul %13, %14, %cst_18 {dimension_numbers = #tpu.dot_dimension_numbers<[1], [0], [0], [1], [0, 0, 1, 1], [], []>} : vector<64x320xbf16>, vector<320x128xbf16>, vector<64x128xf32> -> vector<64x128xf32>
    %16 = arith.truncf %15 : vector<64x128xf32> to vector<64x128xbf16>
    %c0_19 = arith.constant 0 : index
    %c0_20 = arith.constant 0 : index
    %17 = vector.load %arg8[%c0_19, %c0_20] : memref<256x64xbf16, #tpu.memory_space<vmem>>, vector<256x64xbf16>
    %cst_21 = arith.constant dense<0.000000e+00> : vector<256x128xf32>
    %18 = tpu.matmul %17, %16, %cst_21 {dimension_numbers = #tpu.dot_dimension_numbers<[1], [0], [0], [1], [0, 0, 1, 1], [], []>} : vector<256x64xbf16>, vector<64x128xbf16>, vector<256x128xf32> -> vector<256x128xf32>
    %19 = arith.addf %11, %18 : vector<256x128xf32>
    %20 = vector.shape_cast %19 : vector<256x128xf32> to vector<4x64x128xf32>
    %c0_22 = arith.constant 0 : index
    %c0_23 = arith.constant 0 : index
    %c0_24 = arith.constant 0 : index
    %21 = vector.load %arg9[%c0_22, %c0_23, %c0_24] : memref<4x64x128xf32, #tpu.memory_space<vmem>>, vector<4x64x128xf32>
    tpu.vector_store %arg9[%c0_22, %c0_23, %c0_24], %20 {strides = array<i32>} : memref<4x64x128xf32, #tpu.memory_space<vmem>>, vector<4x64x128xf32>,
    return
  }
  func.func @transform_0(%arg0: i32) -> (i32, i32, i32) {
    %c0_i32 = arith.constant 0 : i32
    %c0_i32_0 = arith.constant 0 : i32
    %c0_i32_1 = arith.constant 0 : i32
    return %arg0, %c0_i32, %c0_i32_0 : i32, i32, i32
  }
  func.func @transform_1(%arg0: i32) -> (i32, i32, i32) {
    %c0_i32 = arith.constant 0 : i32
    %c0_i32_0 = arith.constant 0 : i32
    %c0_i32_1 = arith.constant 0 : i32
    return %arg0, %c0_i32, %c0_i32_0 : i32, i32, i32
  }
  func.func @transform_2(%arg0: i32) -> (i32, i32, i32) {
    %c0_i32 = arith.constant 0 : i32
    %c0_i32_0 = arith.constant 0 : i32
    %c0_i32_1 = arith.constant 0 : i32
    return %arg0, %c0_i32, %c0_i32_0 : i32, i32, i32
  }
  func.func @transform_3(%arg0: i32) -> (i32, i32) {
    %c0_i32 = arith.constant 0 : i32
    %c0_i32_0 = arith.constant 0 : i32
    %c0_i32_1 = arith.constant 0 : i32
    return %c0_i32, %c0_i32_0 : i32, i32
  }
  func.func @transform_4(%arg0: i32) -> (i32, i32) {
    %c0_i32 = arith.constant 0 : i32
    %c0_i32_0 = arith.constant 0 : i32
    %c0_i32_1 = arith.constant 0 : i32
    return %c0_i32, %c0_i32_0 : i32, i32
  }
  func.func @transform_5(%arg0: i32) -> (i32, i32) {
    %c0_i32 = arith.constant 0 : i32
    %c0_i32_0 = arith.constant 0 : i32
    %c0_i32_1 = arith.constant 0 : i32
    return %c0_i32, %c0_i32_0 : i32, i32
  }
  func.func @transform_6(%arg0: i32) -> (i32, i32) {
    %c0_i32 = arith.constant 0 : i32
    %c0_i32_0 = arith.constant 0 : i32
    %c0_i32_1 = arith.constant 0 : i32
    return %c0_i32, %c0_i32_0 : i32, i32
  }
  func.func @transform_7(%arg0: i32) -> (i32, i32) {
    %c0_i32 = arith.constant 0 : i32
    %c0_i32_0 = arith.constant 0 : i32
    %c0_i32_1 = arith.constant 0 : i32
    return %c0_i32, %c0_i32_0 : i32, i32
  }
  func.func @transform_8(%arg0: i32) -> (i32, i32, i32) {
    %c0_i32 = arith.constant 0 : i32
    %c0_i32_0 = arith.constant 0 : i32
    %c0_i32_1 = arith.constant 0 : i32
    return %arg0, %c0_i32, %c0_i32_0 : i32, i32, i32
  }
}

</mosaic_0001>

<llo_original>
// kernel: _aux_x_nhwc.1
$region0: #{_aux_x_nhwc.1}
  #allocation0 [shape = 'u32[]', space=smem, size = 0x4, offset = 0x4, fixed_abs, tag = 'smem constant byte address 0x4 - core index']
  #allocation1 [shape = 'u32[72,128]{1,0:T(1,128)}', space=vmem, size = 0x9000, scoped, tag = 'internal scratch']
  %s0 = inlined_call_operand.vmem [shape: bf16[4,256,64], index: 0, kind: input, shape index: {}]
  %s1 = inlined_call_operand.vmem [shape: bf16[4,64,128], index: 1, kind: input, shape index: {}]
  %s2 = inlined_call_operand.vmem [shape: bf16[4,16,320], index: 2, kind: input, shape index: {}]
  %s3 = inlined_call_operand.vmem [shape: bf16[64,128], index: 3, kind: input, shape index: {}]
  %s4 = inlined_call_operand.vmem [shape: bf16[128,128], index: 4, kind: input, shape index: {}]
  %s5 = inlined_call_operand.vmem [shape: bf16[320,128], index: 5, kind: input, shape index: {}]
  %s6 = inlined_call_operand.vmem [shape: bf16[256,1024], index: 6, kind: input, shape index: {}]
  %s7 = inlined_call_operand.vmem [shape: bf16[256,64], index: 7, kind: input, shape index: {}]
  %s8 = inlined_call_operand.hbm [shape: f32[4,64,128], index: 8, kind: output, shape index: {}]
  %s9 = sld [smem:[#allocation0]]
  $region42: #{_aux_x_nhwc.1} parent=0
    _
  %s11 = ssub.s32 1, %s9
  %s12 = scalar_select 0, %s11, %s9
  $region1: #{_aux_x_nhwc.1} parent=0
    #allocation2 [shape = 'u8[131072]{0}', space=vmem, size = 0x20000, scoped, tag = 'output window, operand 0, single buffered']
    #allocation3 [shape = 's32[1]{0}', space=sflag, size = 0x4, scoped, tag = 'scoped memory for _aux_x_nhwc.1']
    %13 = vsyncpa [#allocation3], 0
    // Predicated region
    $region2: #{_aux_x_nhwc.1} parent=1 // pred_check
      _
    $region3: #{_aux_x_nhwc.1} parent=1 // pred_check_branch
      %15 = sbr.rel (0) target = $region5
    $region4: #{_aux_x_nhwc.1} parent=1 // pred_region
      _
    $region5: #{_aux_x_nhwc.1} parent=1 // pred_fallthru
      _
    // Predicated region
    $region6: #{_aux_x_nhwc.1} parent=1 // pred_check
      _
    $region7: #{_aux_x_nhwc.1} parent=1 // pred_check_branch
      %17 = sbr.rel (0) target = $region9
    $region8: #{_aux_x_nhwc.1} parent=1 // pred_region
      _
    $region9: #{_aux_x_nhwc.1} parent=1 // pred_fallthru
      _
    // Predicated region
    $region10: #{_aux_x_nhwc.1} parent=1 // pred_check
      _
    $region11: #{_aux_x_nhwc.1} parent=1 // pred_check_branch
      %19 = sbr.rel (0) target = $region13
    $region12: #{_aux_x_nhwc.1} parent=1 // pred_region
      _
    $region13: #{_aux_x_nhwc.1} parent=1 // pred_fallthru
      _
    // Predicated region
    $region14: #{_aux_x_nhwc.1} parent=1 // pred_check
      _
    $region15: #{_aux_x_nhwc.1} parent=1 // pred_check_branch
      %21 = sbr.rel (0) target = $region17
    $region16: #{_aux_x_nhwc.1} parent=1 // pred_region
      _
    $region17: #{_aux_x_nhwc.1} parent=1 // pred_fallthru
      _
    // Predicated region
    $region18: #{_aux_x_nhwc.1} parent=1 // pred_check
      _
    $region19: #{_aux_x_nhwc.1} parent=1 // pred_check_branch
      %23 = sbr.rel (0) target = $region21
    $region20: #{_aux_x_nhwc.1} parent=1 // pred_region
      _
    $region21: #{_aux_x_nhwc.1} parent=1 // pred_fallthru
      _
    // Predicated region
    $region22: #{_aux_x_nhwc.1} parent=1 // pred_check
      _
    $region23: #{_aux_x_nhwc.1} parent=1 // pred_check_branch
      %25 = sbr.rel (0) target = $region25
    $region24: #{_aux_x_nhwc.1} parent=1 // pred_region
      _
    $region25: #{_aux_x_nhwc.1} parent=1 // pred_fallthru
      _
    // Predicated region
    $region26: #{_aux_x_nhwc.1} parent=1 // pred_check
      _
    $region27: #{_aux_x_nhwc.1} parent=1 // pred_check_branch
      %27 = sbr.rel (0) target = $region29
    $region28: #{_aux_x_nhwc.1} parent=1 // pred_region
      _
    $region29: #{_aux_x_nhwc.1} parent=1 // pred_fallthru
      _
    // Predicated region
    $region30: #{_aux_x_nhwc.1} parent=1 // pred_check
      _
    $region31: #{_aux_x_nhwc.1} parent=1 // pred_check_branch
      %29 = sbr.rel (0) target = $region33
    $region32: #{_aux_x_nhwc.1} parent=1 // pred_region
      _
    $region33: #{_aux_x_nhwc.1} parent=1 // pred_fallthru
      _
    %v31 = vld [vmem:[%s1] sm:$0xf]
    %v32 = vld [vmem:[%s1 + $0x4] sm:$0xf]
    %v33 = vld [vmem:[%s1 + $0x8] sm:$0xf]
    %v34 = vld [vmem:[%s1 + $0xc] sm:$0xf]
    %v35 = vld [vmem:[%s1 + $0x10] sm:$0xf]
    %v36 = vld [vmem:[%s1 + $0x14] sm:$0xf]
    %v37 = vld [vmem:[%s1 + $0x18] sm:$0xf]
    %v38 = vld [vmem:[%s1 + $0x1c] sm:$0xf]
    %v39 = vld [vmem:[%s1 + $0x20] sm:$0xf]
    %v40 = vld [vmem:[%s1 + $0x24] sm:$0xf]
    %v41 = vld [vmem:[%s1 + $0x28] sm:$0xf]
    %v42 = vld [vmem:[%s1 + $0x2c] sm:$0xf]
    %v43 = vld [vmem:[%s1 + $0x30] sm:$0xf]
    %v44 = vld [vmem:[%s1 + $0x34] sm:$0xf]
    %v45 = vld [vmem:[%s1 + $0x38] sm:$0xf]
    %v46 = vld [vmem:[%s1 + $0x3c] sm:$0xf]
    %v47 = vld [vmem:[%s1 + $0x40] sm:$0xf]
    %v48 = vld [vmem:[%s1 + $0x44] sm:$0xf]
    %v49 = vld [vmem:[%s1 + $0x48] sm:$0xf]
    %v50 = vld [vmem:[%s1 + $0x4c] sm:$0xf]
    %v51 = vld [vmem:[%s1 + $0x50] sm:$0xf]
    %v52 = vld [vmem:[%s1 + $0x54] sm:$0xf]
    %v53 = vld [vmem:[%s1 + $0x58] sm:$0xf]
    %v54 = vld [vmem:[%s1 + $0x5c] sm:$0xf]
    %v55 = vld [vmem:[%s1 + $0x60] sm:$0xf]
    %v56 = vld [vmem:[%s1 + $0x64] sm:$0xf]
    %v57 = vld [vmem:[%s1 + $0x68] sm:$0xf]
    %v58 = vld [vmem:[%s1 + $0x6c] sm:$0xf]
    %v59 = vld [vmem:[%s1 + $0x70] sm:$0xf]
    %v60 = vld [vmem:[%s1 + $0x74] sm:$0xf]
    %v61 = vld [vmem:[%s1 + $0x78] sm:$0xf]
    %v62 = vld [vmem:[%s1 + $0x7c] sm:$0xf]
    %v63 = vld [vmem:[%s4] sm:$0xf]
    %v64 = vld [vmem:[%s4 + $0x4] sm:$0xf]
    %v65 = vld [vmem:[%s4 + $0x8] sm:$0xf]
    %v66 = vld [vmem:[%s4 + $0xc] sm:$0xf]
    %v67 = vld [vmem:[%s4 + $0x10] sm:$0xf]
    %v68 = vld [vmem:[%s4 + $0x14] sm:$0xf]
    %v69 = vld [vmem:[%s4 + $0x18] sm:$0xf]
    %v70 = vld [vmem:[%s4 + $0x1c] sm:$0xf]
    %v71 = vld [vmem:[%s4 + $0x20] sm:$0xf]
    %v72 = vld [vmem:[%s4 + $0x24] sm:$0xf]
    %v73 = vld [vmem:[%s4 + $0x28] sm:$0xf]
    %v74 = vld [vmem:[%s4 + $0x2c] sm:$0xf]
    %v75 = vld [vmem:[%s4 + $0x30] sm:$0xf]
    %v76 = vld [vmem:[%s4 + $0x34] sm:$0xf]
    %v77 = vld [vmem:[%s4 + $0x38] sm:$0xf]
    %v78 = vld [vmem:[%s4 + $0x3c] sm:$0xf]
    %v79 = vld [vmem:[%s6] sm:$0xff]
    %v80 = vld [vmem:[%s6 + $0x8] sm:$0xff]
    %v81 = vld [vmem:[%s6 + $0x10] sm:$0xff]
    %v82 = vld [vmem:[%s6 + $0x18] sm:$0xff]
    %v83 = vld [vmem:[%s6 + $0x20] sm:$0xff]
    %v84 = vld [vmem:[%s6 + $0x28] sm:$0xff]
    %v85 = vld [vmem:[%s6 + $0x30] sm:$0xff]
    %v86 = vld [vmem:[%s6 + $0x38] sm:$0xff]
    %v87 = vld [vmem:[%s6 + $0x40] sm:$0xff]
    %v88 = vld [vmem:[%s6 + $0x48] sm:$0xff]
    %v89 = vld [vmem:[%s6 + $0x50] sm:$0xff]
    %v90 = vld [vmem:[%s6 + $0x58] sm:$0xff]
    %v91 = vld [vmem:[%s6 + $0x60] sm:$0xff]
    %v92 = vld [vmem:[%s6 + $0x68] sm:$0xff]
    %v93 = vld [vmem:[%s6 + $0x70] sm:$0xff]
    %v94 = vld [vmem:[%s6 + $0x78] sm:$0xff]
    %v95 = vld [vmem:[%s6 + $0x80] sm:$0xff]
    %v96 = vld [vmem:[%s6 + $0x88] sm:$0xff]
    %v97 = vld [vmem:[%s6 + $0x90] sm:$0xff]
    %v98 = vld [vmem:[%s6 + $0x98] sm:$0xff]
    %v99 = vld [vmem:[%s6 + $0xa0] sm:$0xff]
    %v100 = vld [vmem:[%s6 + $0xa8] sm:$0xff]
    %v101 = vld [vmem:[%s6 + $0xb0] sm:$0xff]
    %v102 = vld [vmem:[%s6 + $0xb8] sm:$0xff]
    %v103 = vld [vmem:[%s6 + $0xc0] sm:$0xff]
    %v104 = vld [vmem:[%s6 + $0xc8] sm:$0xff]
    %v105 = vld [vmem:[%s6 + $0xd0] sm:$0xff]
    %v106 = vld [vmem:[%s6 + $0xd8] sm:$0xff]
    %v107 = vld [vmem:[%s6 + $0xe0] sm:$0xff]
    %v108 = vld [vmem:[%s6 + $0xe8] sm:$0xff]
    %v109 = vld [vmem:[%s6 + $0xf0] sm:$0xff]
    %v110 = vld [vmem:[%s6 + $0xf8] sm:$0xff]
    %v111 = vld [vmem:[%s6 + $0x100] sm:$0xff]
    %v112 = vld [vmem:[%s6 + $0x108] sm:$0xff]
    %v113 = vld [vmem:[%s6 + $0x110] sm:$0xff]
    %v114 = vld [vmem:[%s6 + $0x118] sm:$0xff]
    %v115 = vld [vmem:[%s6 + $0x120] sm:$0xff]
    %v116 = vld [vmem:[%s6 + $0x128] sm:$0xff]
    %v117 = vld [vmem:[%s6 + $0x130] sm:$0xff]
    %v118 = vld [vmem:[%s6 + $0x138] sm:$0xff]
    %v119 = vld [vmem:[%s6 + $0x140] sm:$0xff]
    %v120 = vld [vmem:[%s6 + $0x148] sm:$0xff]
    %v121 = vld [vmem:[%s6 + $0x150] sm:$0xff]
    %v122 = vld [vmem:[%s6 + $0x158] sm:$0xff]
    %v123 = vld [vmem:[%s6 + $0x160] sm:$0xff]
    %v124 = vld [vmem:[%s6 + $0x168] sm:$0xff]
    %v125 = vld [vmem:[%s6 + $0x170] sm:$0xff]
    %v126 = vld [vmem:[%s6 + $0x178] sm:$0xff]
    %v127 = vld [vmem:[%s6 + $0x180] sm:$0xff]
    %v128 = vld [vmem:[%s6 + $0x188] sm:$0xff]
    %v129 = vld [vmem:[%s6 + $0x190] sm:$0xff]
    %v130 = vld [vmem:[%s6 + $0x198] sm:$0xff]
    %v131 = vld [vmem:[%s6 + $0x1a0] sm:$0xff]
    %v132 = vld [vmem:[%s6 + $0x1a8] sm:$0xff]
    %v133 = vld [vmem:[%s6 + $0x1b0] sm:$0xff]
    %v134 = vld [vmem:[%s6 + $0x1b8] sm:$0xff]
    %v135 = vld [vmem:[%s6 + $0x1c0] sm:$0xff]
    %v136 = vld [vmem:[%s6 + $0x1c8] sm:$0xff]
    %v137 = vld [vmem:[%s6 + $0x1d0] sm:$0xff]
    %v138 = vld [vmem:[%s6 + $0x1d8] sm:$0xff]
    %v139 = vld [vmem:[%s6 + $0x1e0] sm:$0xff]
    %v140 = vld [vmem:[%s6 + $0x1e8] sm:$0xff]
    %v141 = vld [vmem:[%s6 + $0x1f0] sm:$0xff]
    %v142 = vld [vmem:[%s6 + $0x1f8] sm:$0xff]
    %v143 = vld [vmem:[%s6 + $0x200] sm:$0xff]
    %v144 = vld [vmem:[%s6 + $0x208] sm:$0xff]
    %v145 = vld [vmem:[%s6 + $0x210] sm:$0xff]
    %v146 = vld [vmem:[%s6 + $0x218] sm:$0xff]
    %v147 = vld [vmem:[%s6 + $0x220] sm:$0xff]
    %v148 = vld [vmem:[%s6 + $0x228] sm:$0xff]
    %v149 = vld [vmem:[%s6 + $0x230] sm:$0xff]
    %v150 = vld [vmem:[%s6 + $0x238] sm:$0xff]
    %v151 = vld [vmem:[%s6 + $0x240] sm:$0xff]
    %v152 = vld [vmem:[%s6 + $0x248] sm:$0xff]
    %v153 = vld [vmem:[%s6 + $0x250] sm:$0xff]
    %v154 = vld [vmem:[%s6 + $0x258] sm:$0xff]
    %v155 = vld [vmem:[%s6 + $0x260] sm:$0xff]
    %v156 = vld [vmem:[%s6 + $0x268] sm:$0xff]
    %v157 = vld [vmem:[%s6 + $0x270] sm:$0xff]
    %v158 = vld [vmem:[%s6 + $0x278] sm:$0xff]
    %v159 = vld [vmem:[%s6 + $0x280] sm:$0xff]
    %v160 = vld [vmem:[%s6 + $0x288] sm:$0xff]
    %v161 = vld [vmem:[%s6 + $0x290] sm:$0xff]
    %v162 = vld [vmem:[%s6 + $0x298] sm:$0xff]
    %v163 = vld [vmem:[%s6 + $0x2a0] sm:$0xff]
    %v164 = vld [vmem:[%s6 + $0x2a8] sm:$0xff]
    %v165 = vld [vmem:[%s6 + $0x2b0] sm:$0xff]
    %v166 = vld [vmem:[%s6 + $0x2b8] sm:$0xff]
    %v167 = vld [vmem:[%s6 + $0x2c0] sm:$0xff]
    %v168 = vld [vmem:[%s6 + $0x2c8] sm:$0xff]
    %v169 = vld [vmem:[%s6 + $0x2d0] sm:$0xff]
    %v170 = vld [vmem:[%s6 + $0x2d8] sm:$0xff]
    %v171 = vld [vmem:[%s6 + $0x2e0] sm:$0xff]
    %v172 = vld [vmem:[%s6 + $0x2e8] sm:$0xff]
    %v173 = vld [vmem:[%s6 + $0x2f0] sm:$0xff]
    %v174 = vld [vmem:[%s6 + $0x2f8] sm:$0xff]
    %v175 = vld [vmem:[%s6 + $0x300] sm:$0xff]
    %v176 = vld [vmem:[%s6 + $0x308] sm:$0xff]
    %v177 = vld [vmem:[%s6 + $0x310] sm:$0xff]
    %v178 = vld [vmem:[%s6 + $0x318] sm:$0xff]
    %v179 = vld [vmem:[%s6 + $0x320] sm:$0xff]
    %v180 = vld [vmem:[%s6 + $0x328] sm:$0xff]
    %v181 = vld [vmem:[%s6 + $0x330] sm:$0xff]
    %v182 = vld [vmem:[%s6 + $0x338] sm:$0xff]
    %v183 = vld [vmem:[%s6 + $0x340] sm:$0xff]
    %v184 = vld [vmem:[%s6 + $0x348] sm:$0xff]
    %v185 = vld [vmem:[%s6 + $0x350] sm:$0xff]
    %v186 = vld [vmem:[%s6 + $0x358] sm:$0xff]
    %v187 = vld [vmem:[%s6 + $0x360] sm:$0xff]
    %v188 = vld [vmem:[%s6 + $0x368] sm:$0xff]
    %v189 = vld [vmem:[%s6 + $0x370] sm:$0xff]
    %v190 = vld [vmem:[%s6 + $0x378] sm:$0xff]
    %v191 = vld [vmem:[%s6 + $0x380] sm:$0xff]
    %v192 = vld [vmem:[%s6 + $0x388] sm:$0xff]
    %v193 = vld [vmem:[%s6 + $0x390] sm:$0xff]
    %v194 = vld [vmem:[%s6 + $0x398] sm:$0xff]
    %v195 = vld [vmem:[%s6 + $0x3a0] sm:$0xff]
    %v196 = vld [vmem:[%s6 + $0x3a8] sm:$0xff]
    %v197 = vld [vmem:[%s6 + $0x3b0] sm:$0xff]
    %v198 = vld [vmem:[%s6 + $0x3b8] sm:$0xff]
    %v199 = vld [vmem:[%s6 + $0x3c0] sm:$0xff]
    %v200 = vld [vmem:[%s6 + $0x3c8] sm:$0xff]
    %v201 = vld [vmem:[%s6 + $0x3d0] sm:$0xff]
    %v202 = vld [vmem:[%s6 + $0x3d8] sm:$0xff]
    %v203 = vld [vmem:[%s6 + $0x3e0] sm:$0xff]
    %v204 = vld [vmem:[%s6 + $0x3e8] sm:$0xff]
    %v205 = vld [vmem:[%s6 + $0x3f0] sm:$0xff]
    %v206 = vld [vmem:[%s6 + $0x3f8] sm:$0xff]
    %v207 = vld [vmem:[%s0] sm:$0xf]
    %v208 = vld [vmem:[%s0 + $0x4] sm:$0xf]
    %v209 = vld [vmem:[%s0 + $0x8] sm:$0xf]
    %v210 = vld [vmem:[%s0 + $0xc] sm:$0xf]
    %v211 = vld [vmem:[%s0 + $0x10] sm:$0xf]
    %v212 = vld [vmem:[%s0 + $0x14] sm:$0xf]
    %v213 = vld [vmem:[%s0 + $0x18] sm:$0xf]
    %v214 = vld [vmem:[%s0 + $0x1c] sm:$0xf]
    %v215 = vld [vmem:[%s0 + $0x20] sm:$0xf]
    %v216 = vld [vmem:[%s0 + $0x24] sm:$0xf]
    %v217 = vld [vmem:[%s0 + $0x28] sm:$0xf]
    %v218 = vld [vmem:[%s0 + $0x2c] sm:$0xf]
    %v219 = vld [vmem:[%s0 + $0x30] sm:$0xf]
    %v220 = vld [vmem:[%s0 + $0x34] sm:$0xf]
    %v221 = vld [vmem:[%s0 + $0x38] sm:$0xf]
    %v222 = vld [vmem:[%s0 + $0x3c] sm:$0xf]
    %v223 = vld [vmem:[%s0 + $0x40] sm:$0xf]
    %v224 = vld [vmem:[%s0 + $0x44] sm:$0xf]
    %v225 = vld [vmem:[%s0 + $0x48] sm:$0xf]
    %v226 = vld [vmem:[%s0 + $0x4c] sm:$0xf]
    %v227 = vld [vmem:[%s0 + $0x50] sm:$0xf]
    %v228 = vld [vmem:[%s0 + $0x54] sm:$0xf]
    %v229 = vld [vmem:[%s0 + $0x58] sm:$0xf]
    %v230 = vld [vmem:[%s0 + $0x5c] sm:$0xf]
    %v231 = vld [vmem:[%s0 + $0x60] sm:$0xf]
    %v232 = vld [vmem:[%s0 + $0x64] sm:$0xf]
    %v233 = vld [vmem:[%s0 + $0x68] sm:$0xf]
    %v234 = vld [vmem:[%s0 + $0x6c] sm:$0xf]
    %v235 = vld [vmem:[%s0 + $0x70] sm:$0xf]
    %v236 = vld [vmem:[%s0 + $0x74] sm:$0xf]
    %v237 = vld [vmem:[%s0 + $0x78] sm:$0xf]
    %v238 = vld [vmem:[%s0 + $0x7c] sm:$0xf]
    %v239 = vld [vmem:[%s0 + $0x80] sm:$0xf]
    %v240 = vld [vmem:[%s0 + $0x84] sm:$0xf]
    %v241 = vld [vmem:[%s0 + $0x88] sm:$0xf]
    %v242 = vld [vmem:[%s0 + $0x8c] sm:$0xf]
    %v243 = vld [vmem:[%s0 + $0x90] sm:$0xf]
    %v244 = vld [vmem:[%s0 + $0x94] sm:$0xf]
    %v245 = vld [vmem:[%s0 + $0x98] sm:$0xf]
    %v246 = vld [vmem:[%s0 + $0x9c] sm:$0xf]
    %v247 = vld [vmem:[%s0 + $0xa0] sm:$0xf]
    %v248 = vld [vmem:[%s0 + $0xa4] sm:$0xf]
    %v249 = vld [vmem:[%s0 + $0xa8] sm:$0xf]
    %v250 = vld [vmem:[%s0 + $0xac] sm:$0xf]
    %v251 = vld [vmem:[%s0 + $0xb0] sm:$0xf]
    %v252 = vld [vmem:[%s0 + $0xb4] sm:$0xf]
    %v253 = vld [vmem:[%s0 + $0xb8] sm:$0xf]
    %v254 = vld [vmem:[%s0 + $0xbc] sm:$0xf]
    %v255 = vld [vmem:[%s0 + $0xc0] sm:$0xf]
    %v256 = vld [vmem:[%s0 + $0xc4] sm:$0xf]
    %v257 = vld [vmem:[%s0 + $0xc8] sm:$0xf]
    %v258 = vld [vmem:[%s0 + $0xcc] sm:$0xf]
    %v259 = vld [vmem:[%s0 + $0xd0] sm:$0xf]
    %v260 = vld [vmem:[%s0 + $0xd4] sm:$0xf]
    %v261 = vld [vmem:[%s0 + $0xd8] sm:$0xf]
    %v262 = vld [vmem:[%s0 + $0xdc] sm:$0xf]
    %v263 = vld [vmem:[%s0 + $0xe0] sm:$0xf]
    %v264 = vld [vmem:[%s0 + $0xe4] sm:$0xf]
    %v265 = vld [vmem:[%s0 + $0xe8] sm:$0xf]
    %v266 = vld [vmem:[%s0 + $0xec] sm:$0xf]
    %v267 = vld [vmem:[%s0 + $0xf0] sm:$0xf]
    %v268 = vld [vmem:[%s0 + $0xf4] sm:$0xf]
    %v269 = vld [vmem:[%s0 + $0xf8] sm:$0xf]
    %v270 = vld [vmem:[%s0 + $0xfc] sm:$0xf]
    %v271 = vld [vmem:[%s0 + $0x100] sm:$0xf]
    %v272 = vld [vmem:[%s0 + $0x104] sm:$0xf]
    %v273 = vld [vmem:[%s0 + $0x108] sm:$0xf]
    %v274 = vld [vmem:[%s0 + $0x10c] sm:$0xf]
    %v275 = vld [vmem:[%s0 + $0x110] sm:$0xf]
    %v276 = vld [vmem:[%s0 + $0x114] sm:$0xf]
    %v277 = vld [vmem:[%s0 + $0x118] sm:$0xf]
    %v278 = vld [vmem:[%s0 + $0x11c] sm:$0xf]
    %v279 = vld [vmem:[%s0 + $0x120] sm:$0xf]
    %v280 = vld [vmem:[%s0 + $0x124] sm:$0xf]
    %v281 = vld [vmem:[%s0 + $0x128] sm:$0xf]
    %v282 = vld [vmem:[%s0 + $0x12c] sm:$0xf]
    %v283 = vld [vmem:[%s0 + $0x130] sm:$0xf]
    %v284 = vld [vmem:[%s0 + $0x134] sm:$0xf]
    %v285 = vld [vmem:[%s0 + $0x138] sm:$0xf]
    %v286 = vld [vmem:[%s0 + $0x13c] sm:$0xf]
    %v287 = vld [vmem:[%s0 + $0x140] sm:$0xf]
    %v288 = vld [vmem:[%s0 + $0x144] sm:$0xf]
    %v289 = vld [vmem:[%s0 + $0x148] sm:$0xf]
    %v290 = vld [vmem:[%s0 + $0x14c] sm:$0xf]
    %v291 = vld [vmem:[%s0 + $0x150] sm:$0xf]
    %v292 = vld [vmem:[%s0 + $0x154] sm:$0xf]
    %v293 = vld [vmem:[%s0 + $0x158] sm:$0xf]
    %v294 = vld [vmem:[%s0 + $0x15c] sm:$0xf]
    %v295 = vld [vmem:[%s0 + $0x160] sm:$0xf]
    %v296 = vld [vmem:[%s0 + $0x164] sm:$0xf]
    %v297 = vld [vmem:[%s0 + $0x168] sm:$0xf]
    %v298 = vld [vmem:[%s0 + $0x16c] sm:$0xf]
    %v299 = vld [vmem:[%s0 + $0x170] sm:$0xf]
    %v300 = vld [vmem:[%s0 + $0x174] sm:$0xf]
    %v301 = vld [vmem:[%s0 + $0x178] sm:$0xf]
    %v302 = vld [vmem:[%s0 + $0x17c] sm:$0xf]
    %v303 = vld [vmem:[%s0 + $0x180] sm:$0xf]
    %v304 = vld [vmem:[%s0 + $0x184] sm:$0xf]
    %v305 = vld [vmem:[%s0 + $0x188] sm:$0xf]
    %v306 = vld [vmem:[%s0 + $0x18c] sm:$0xf]
    %v307 = vld [vmem:[%s0 + $0x190] sm:$0xf]
    %v308 = vld [vmem:[%s0 + $0x194] sm:$0xf]
    %v309 = vld [vmem:[%s0 + $0x198] sm:$0xf]
    %v310 = vld [vmem:[%s0 + $0x19c] sm:$0xf]
    %v311 = vld [vmem:[%s0 + $0x1a0] sm:$0xf]
    %v312 = vld [vmem:[%s0 + $0x1a4] sm:$0xf]
    %v313 = vld [vmem:[%s0 + $0x1a8] sm:$0xf]
    %v314 = vld [vmem:[%s0 + $0x1ac] sm:$0xf]
    %v315 = vld [vmem:[%s0 + $0x1b0] sm:$0xf]
    %v316 = vld [vmem:[%s0 + $0x1b4] sm:$0xf]
    %v317 = vld [vmem:[%s0 + $0x1b8] sm:$0xf]
    %v318 = vld [vmem:[%s0 + $0x1bc] sm:$0xf]
    %v319 = vld [vmem:[%s0 + $0x1c0] sm:$0xf]
    %v320 = vld [vmem:[%s0 + $0x1c4] sm:$0xf]
    %v321 = vld [vmem:[%s0 + $0x1c8] sm:$0xf]
    %v322 = vld [vmem:[%s0 + $0x1cc] sm:$0xf]
    %v323 = vld [vmem:[%s0 + $0x1d0] sm:$0xf]
    %v324 = vld [vmem:[%s0 + $0x1d4] sm:$0xf]
    %v325 = vld [vmem:[%s0 + $0x1d8] sm:$0xf]
    %v326 = vld [vmem:[%s0 + $0x1dc] sm:$0xf]
    %v327 = vld [vmem:[%s0 + $0x1e0] sm:$0xf]
    %v328 = vld [vmem:[%s0 + $0x1e4] sm:$0xf]
    %v329 = vld [vmem:[%s0 + $0x1e8] sm:$0xf]
    %v330 = vld [vmem:[%s0 + $0x1ec] sm:$0xf]
    %v331 = vld [vmem:[%s0 + $0x1f0] sm:$0xf]
    %v332 = vld [vmem:[%s0 + $0x1f4] sm:$0xf]
    %v333 = vld [vmem:[%s0 + $0x1f8] sm:$0xf]
    %v334 = vld [vmem:[%s0 + $0x1fc] sm:$0xf]
    %v463 = vunpack.c.l.b16 %v79
    %v464 = vunpack.c.h.b16 %v79
    %v465 = vunpack.c.l.b16 %v80
    %v466 = vunpack.c.h.b16 %v80
    %v467 = vunpack.c.l.b16 %v81
    %v468 = vunpack.c.h.b16 %v81
    %v469 = vunpack.c.l.b16 %v82
    %v470 = vunpack.c.h.b16 %v82
    %v471 = vunpack.c.l.b16 %v83
    %v472 = vunpack.c.h.b16 %v83
    %v473 = vunpack.c.l.b16 %v84
    %v474 = vunpack.c.h.b16 %v84
    %v475 = vunpack.c.l.b16 %v85
    %v476 = vunpack.c.h.b16 %v85
    %v477 = vunpack.c.l.b16 %v86
    %v478 = vunpack.c.h.b16 %v86
    %v479 = vunpack.c.l.b16 %v87
    %v480 = vunpack.c.h.b16 %v87
    %v481 = vunpack.c.l.b16 %v88
    %v482 = vunpack.c.h.b16 %v88
    %v483 = vunpack.c.l.b16 %v89
    %v484 = vunpack.c.h.b16 %v89
    %v485 = vunpack.c.l.b16 %v90
    %v486 = vunpack.c.h.b16 %v90
    %v487 = vunpack.c.l.b16 %v91
    %v488 = vunpack.c.h.b16 %v91
    %v489 = vunpack.c.l.b16 %v92
    %v490 = vunpack.c.h.b16 %v92
    %v491 = vunpack.c.l.b16 %v93
    %v492 = vunpack.c.h.b16 %v93
    %v493 = vunpack.c.l.b16 %v94
    %v494 = vunpack.c.h.b16 %v94
    %v495 = vunpack.c.l.b16 %v95
    %v496 = vunpack.c.h.b16 %v95
    %v497 = vunpack.c.l.b16 %v96
    %v498 = vunpack.c.h.b16 %v96
    %v499 = vunpack.c.l.b16 %v97
    %v500 = vunpack.c.h.b16 %v97
    %v501 = vunpack.c.l.b16 %v98
    %v502 = vunpack.c.h.b16 %v98
    %v503 = vunpack.c.l.b16 %v99
    %v504 = vunpack.c.h.b16 %v99
    %v505 = vunpack.c.l.b16 %v100
    %v506 = vunpack.c.h.b16 %v100
    %v507 = vunpack.c.l.b16 %v101
    %v508 = vunpack.c.h.b16 %v101
    %v509 = vunpack.c.l.b16 %v102
    %v510 = vunpack.c.h.b16 %v102
    %v511 = vunpack.c.l.b16 %v103
    %v512 = vunpack.c.h.b16 %v103
    %v513 = vunpack.c.l.b16 %v104
    %v514 = vunpack.c.h.b16 %v104
    %v515 = vunpack.c.l.b16 %v105
    %v516 = vunpack.c.h.b16 %v105
    %v517 = vunpack.c.l.b16 %v106
    %v518 = vunpack.c.h.b16 %v106
    %v519 = vunpack.c.l.b16 %v107
    %v520 = vunpack.c.h.b16 %v107
    %v521 = vunpack.c.l.b16 %v108
    %v522 = vunpack.c.h.b16 %v108
    %v523 = vunpack.c.l.b16 %v109
    %v524 = vunpack.c.h.b16 %v109
    %v525 = vunpack.c.l.b16 %v110
    %v526 = vunpack.c.h.b16 %v110
    %v527 = vunpack.c.l.b16 %v111
    %v528 = vunpack.c.h.b16 %v111
    %v529 = vunpack.c.l.b16 %v112
    %v530 = vunpack.c.h.b16 %v112
    %v531 = vunpack.c.l.b16 %v113
    %v532 = vunpack.c.h.b16 %v113
    %v533 = vunpack.c.l.b16 %v114
    %v534 = vunpack.c.h.b16 %v114
    %v535 = vunpack.c.l.b16 %v115
    %v536 = vunpack.c.h.b16 %v115
    %v537 = vunpack.c.l.b16 %v116
    %v538 = vunpack.c.h.b16 %v116
    %v539 = vunpack.c.l.b16 %v117
    %v540 = vunpack.c.h.b16 %v117
    %v541 = vunpack.c.l.b16 %v118
    %v542 = vunpack.c.h.b16 %v118
    %v543 = vunpack.c.l.b16 %v119
    %v544 = vunpack.c.h.b16 %v119
    %v545 = vunpack.c.l.b16 %v120
    %v546 = vunpack.c.h.b16 %v120
    %v547 = vunpack.c.l.b16 %v121
    %v548 = vunpack.c.h.b16 %v121
    %v549 = vunpack.c.l.b16 %v122
    %v550 = vunpack.c.h.b16 %v122
    %v551 = vunpack.c.l.b16 %v123
    %v552 = vunpack.c.h.b16 %v123
    %v553 = vunpack.c.l.b16 %v124
    %v554 = vunpack.c.h.b16 %v124
    %v555 = vunpack.c.l.b16 %v125
    %v556 = vunpack.c.h.b16 %v125
    %v557 = vunpack.c.l.b16 %v126
    %v558 = vunpack.c.h.b16 %v126
    %v559 = vunpack.c.l.b16 %v127
    %v560 = vunpack.c.h.b16 %v127
    %v561 = vunpack.c.l.b16 %v128
    %v562 = vunpack.c.h.b16 %v128
    %v563 = vunpack.c.l.b16 %v129
    %v564 = vunpack.c.h.b16 %v129
    %v565 = vunpack.c.l.b16 %v130
    %v566 = vunpack.c.h.b16 %v130
    %v567 = vunpack.c.l.b16 %v131
    %v568 = vunpack.c.h.b16 %v131
    %v569 = vunpack.c.l.b16 %v132
    %v570 = vunpack.c.h.b16 %v132
    %v571 = vunpack.c.l.b16 %v133
    %v572 = vunpack.c.h.b16 %v133
    %v573 = vunpack.c.l.b16 %v134
    %v574 = vunpack.c.h.b16 %v134
    %v575 = vunpack.c.l.b16 %v135
    %v576 = vunpack.c.h.b16 %v135
    %v577 = vunpack.c.l.b16 %v136
    %v578 = vunpack.c.h.b16 %v136
    %v579 = vunpack.c.l.b16 %v137
    %v580 = vunpack.c.h.b16 %v137
    %v581 = vunpack.c.l.b16 %v138
    %v582 = vunpack.c.h.b16 %v138
    %v583 = vunpack.c.l.b16 %v139
    %v584 = vunpack.c.h.b16 %v139
    %v585 = vunpack.c.l.b16 %v140
    %v586 = vunpack.c.h.b16 %v140
    %v587 = vunpack.c.l.b16 %v141
    %v588 = vunpack.c.h.b16 %v141
    %v589 = vunpack.c.l.b16 %v142
    %v590 = vunpack.c.h.b16 %v142
    %v591 = vunpack.c.l.b16 %v143
    %v592 = vunpack.c.h.b16 %v143
    %v593 = vunpack.c.l.b16 %v144
    %v594 = vunpack.c.h.b16 %v144
    %v595 = vunpack.c.l.b16 %v145
    %v596 = vunpack.c.h.b16 %v145
    %v597 = vunpack.c.l.b16 %v146
    %v598 = vunpack.c.h.b16 %v146
    %v599 = vunpack.c.l.b16 %v147
    %v600 = vunpack.c.h.b16 %v147
    %v601 = vunpack.c.l.b16 %v148
    %v602 = vunpack.c.h.b16 %v148
    %v603 = vunpack.c.l.b16 %v149
    %v604 = vunpack.c.h.b16 %v149
    %v605 = vunpack.c.l.b16 %v150
    %v606 = vunpack.c.h.b16 %v150
    %v607 = vunpack.c.l.b16 %v151
    %v608 = vunpack.c.h.b16 %v151
    %v609 = vunpack.c.l.b16 %v152
    %v610 = vunpack.c.h.b16 %v152
    %v611 = vunpack.c.l.b16 %v153
    %v612 = vunpack.c.h.b16 %v153
    %v613 = vunpack.c.l.b16 %v154
    %v614 = vunpack.c.h.b16 %v154
    %v615 = vunpack.c.l.b16 %v155
    %v616 = vunpack.c.h.b16 %v155
    %v617 = vunpack.c.l.b16 %v156
    %v618 = vunpack.c.h.b16 %v156
    %v619 = vunpack.c.l.b16 %v157
    %v620 = vunpack.c.h.b16 %v157
    %v621 = vunpack.c.l.b16 %v158
    %v622 = vunpack.c.h.b16 %v158
    %v623 = vunpack.c.l.b16 %v159
    %v624 = vunpack.c.h.b16 %v159
    %v625 = vunpack.c.l.b16 %v160
    %v626 = vunpack.c.h.b16 %v160
    %v627 = vunpack.c.l.b16 %v161
    %v628 = vunpack.c.h.b16 %v161
    %v629 = vunpack.c.l.b16 %v162
    %v630 = vunpack.c.h.b16 %v162
    %v631 = vunpack.c.l.b16 %v163
    %v632 = vunpack.c.h.b16 %v163
    %v633 = vunpack.c.l.b16 %v164
    %v634 = vunpack.c.h.b16 %v164
    %v635 = vunpack.c.l.b16 %v165
    %v636 = vunpack.c.h.b16 %v165
    %v637 = vunpack.c.l.b16 %v166
    %v638 = vunpack.c.h.b16 %v166
    %v639 = vunpack.c.l.b16 %v167
    %v640 = vunpack.c.h.b16 %v167
    %v641 = vunpack.c.l.b16 %v168
    %v642 = vunpack.c.h.b16 %v168
    %v643 = vunpack.c.l.b16 %v169
    %v644 = vunpack.c.h.b16 %v169
    %v645 = vunpack.c.l.b16 %v170
    %v646 = vunpack.c.h.b16 %v170
    %v647 = vunpack.c.l.b16 %v171
    %v648 = vunpack.c.h.b16 %v171
    %v649 = vunpack.c.l.b16 %v172
    %v650 = vunpack.c.h.b16 %v172
    %v651 = vunpack.c.l.b16 %v173
    %v652 = vunpack.c.h.b16 %v173
    %v653 = vunpack.c.l.b16 %v174
    %v654 = vunpack.c.h.b16 %v174
    %v655 = vunpack.c.l.b16 %v175
    %v656 = vunpack.c.h.b16 %v175
    %v657 = vunpack.c.l.b16 %v176
    %v658 = vunpack.c.h.b16 %v176
    %v659 = vunpack.c.l.b16 %v177
    %v660 = vunpack.c.h.b16 %v177
    %v661 = vunpack.c.l.b16 %v178
    %v662 = vunpack.c.h.b16 %v178
    %v663 = vunpack.c.l.b16 %v179
    %v664 = vunpack.c.h.b16 %v179
    %v665 = vunpack.c.l.b16 %v180
    %v666 = vunpack.c.h.b16 %v180
    %v667 = vunpack.c.l.b16 %v181
    %v668 = vunpack.c.h.b16 %v181
    %v669 = vunpack.c.l.b16 %v182
    %v670 = vunpack.c.h.b16 %v182
    %v671 = vunpack.c.l.b16 %v183
    %v672 = vunpack.c.h.b16 %v183
    %v673 = vunpack.c.l.b16 %v184
    %v674 = vunpack.c.h.b16 %v184
    %v675 = vunpack.c.l.b16 %v185
    %v676 = vunpack.c.h.b16 %v185
    %v677 = vunpack.c.l.b16 %v186
    %v678 = vunpack.c.h.b16 %v186
    %v679 = vunpack.c.l.b16 %v187
    %v680 = vunpack.c.h.b16 %v187
    %v681 = vunpack.c.l.b16 %v188
    %v682 = vunpack.c.h.b16 %v188
    %v683 = vunpack.c.l.b16 %v189
    %v684 = vunpack.c.h.b16 %v189
    %v685 = vunpack.c.l.b16 %v190
    %v686 = vunpack.c.h.b16 %v190
    %v687 = vunpack.c.l.b16 %v191
    %v688 = vunpack.c.h.b16 %v191
    %v689 = vunpack.c.l.b16 %v192
    %v690 = vunpack.c.h.b16 %v192
    %v691 = vunpack.c.l.b16 %v193
    %v692 = vunpack.c.h.b16 %v193
    %v693 = vunpack.c.l.b16 %v194
    %v694 = vunpack.c.h.b16 %v194
    %v695 = vunpack.c.l.b16 %v195
    %v696 = vunpack.c.h.b16 %v195
    %v697 = vunpack.c.l.b16 %v196
    %v698 = vunpack.c.h.b16 %v196
    %v699 = vunpack.c.l.b16 %v197
    %v700 = vunpack.c.h.b16 %v197
    %v701 = vunpack.c.l.b16 %v198
    %v702 = vunpack.c.h.b16 %v198
    %v703 = vunpack.c.l.b16 %v199
    %v704 = vunpack.c.h.b16 %v199
    %v705 = vunpack.c.l.b16 %v200
    %v706 = vunpack.c.h.b16 %v200
    %v707 = vunpack.c.l.b16 %v201
    %v708 = vunpack.c.h.b16 %v201
    %v709 = vunpack.c.l.b16 %v202
    %v710 = vunpack.c.h.b16 %v202
    %v711 = vunpack.c.l.b16 %v203
    %v712 = vunpack.c.h.b16 %v203
    %v713 = vunpack.c.l.b16 %v204
    %v714 = vunpack.c.h.b16 %v204
    %v715 = vunpack.c.l.b16 %v205
    %v716 = vunpack.c.h.b16 %v205
    %v717 = vunpack.c.l.b16 %v206
    %v718 = vunpack.c.h.b16 %v206
    %v719 = vpack.c.b16 %v471, %v463
    %v720 = vpack.c.b16 %v472, %v464
    %v721 = vpack.c.b16 %v473, %v465
    %v722 = vpack.c.b16 %v474, %v466
    %v723 = vpack.c.b16 %v475, %v467
    %v724 = vpack.c.b16 %v476, %v468
    %v725 = vpack.c.b16 %v477, %v469
    %v726 = vpack.c.b16 %v478, %v470
    %v727 = vpack.c.b16 %v487, %v479
    %v728 = vpack.c.b16 %v488, %v480
    %v729 = vpack.c.b16 %v489, %v481
    %v730 = vpack.c.b16 %v490, %v482
    %v731 = vpack.c.b16 %v491, %v483
    %v732 = vpack.c.b16 %v492, %v484
    %v733 = vpack.c.b16 %v493, %v485
    %v734 = vpack.c.b16 %v494, %v486
    %v735 = vpack.c.b16 %v503, %v495
    %v736 = vpack.c.b16 %v504, %v496
    %v737 = vpack.c.b16 %v505, %v497
    %v738 = vpack.c.b16 %v506, %v498
    %v739 = vpack.c.b16 %v507, %v499
    %v740 = vpack.c.b16 %v508, %v500
    %v741 = vpack.c.b16 %v509, %v501
    %v742 = vpack.c.b16 %v510, %v502
    %v743 = vpack.c.b16 %v519, %v511
    %v744 = vpack.c.b16 %v520, %v512
    %v745 = vpack.c.b16 %v521, %v513
    %v746 = vpack.c.b16 %v522, %v514
    %v747 = vpack.c.b16 %v523, %v515
    %v748 = vpack.c.b16 %v524, %v516
    %v749 = vpack.c.b16 %v525, %v517
    %v750 = vpack.c.b16 %v526, %v518
    %v751 = vpack.c.b16 %v535, %v527
    %v752 = vpack.c.b16 %v536, %v528
    %v753 = vpack.c.b16 %v537, %v529
    %v754 = vpack.c.b16 %v538, %v530
    %v755 = vpack.c.b16 %v539, %v531
    %v756 = vpack.c.b16 %v540, %v532
    %v757 = vpack.c.b16 %v541, %v533
    %v758 = vpack.c.b16 %v542, %v534
    %v759 = vpack.c.b16 %v551, %v543
    %v760 = vpack.c.b16 %v552, %v544
    %v761 = vpack.c.b16 %v553, %v545
    %v762 = vpack.c.b16 %v554, %v546
    %v763 = vpack.c.b16 %v555, %v547
    %v764 = vpack.c.b16 %v556, %v548
    %v765 = vpack.c.b16 %v557, %v549
    %v766 = vpack.c.b16 %v558, %v550
    %v767 = vpack.c.b16 %v567, %v559
    %v768 = vpack.c.b16 %v568, %v560
    %v769 = vpack.c.b16 %v569, %v561
    %v770 = vpack.c.b16 %v570, %v562
    %v771 = vpack.c.b16 %v571, %v563
    %v772 = vpack.c.b16 %v572, %v564
    %v773 = vpack.c.b16 %v573, %v565
    %v774 = vpack.c.b16 %v574, %v566
    %v775 = vpack.c.b16 %v583, %v575
    %v776 = vpack.c.b16 %v584, %v576
    %v777 = vpack.c.b16 %v585, %v577
    %v778 = vpack.c.b16 %v586, %v578
    %v779 = vpack.c.b16 %v587, %v579
    %v780 = vpack.c.b16 %v588, %v580
    %v781 = vpack.c.b16 %v589, %v581
    %v782 = vpack.c.b16 %v590, %v582
    %v783 = vpack.c.b16 %v599, %v591
    %v784 = vpack.c.b16 %v600, %v592
    %v785 = vpack.c.b16 %v601, %v593
    %v786 = vpack.c.b16 %v602, %v594
    %v787 = vpack.c.b16 %v603, %v595
    %v788 = vpack.c.b16 %v604, %v596
    %v789 = vpack.c.b16 %v605, %v597
    %v790 = vpack.c.b16 %v606, %v598
    %v791 = vpack.c.b16 %v615, %v607
    %v792 = vpack.c.b16 %v616, %v608
    %v793 = vpack.c.b16 %v617, %v609
    %v794 = vpack.c.b16 %v618, %v610
    %v795 = vpack.c.b16 %v619, %v611
    %v796 = vpack.c.b16 %v620, %v612
    %v797 = vpack.c.b16 %v621, %v613
    %v798 = vpack.c.b16 %v622, %v614
    %v799 = vpack.c.b16 %v631, %v623
    %v800 = vpack.c.b16 %v632, %v624
    %v801 = vpack.c.b16 %v633, %v625
    %v802 = vpack.c.b16 %v634, %v626
    %v803 = vpack.c.b16 %v635, %v627
    %v804 = vpack.c.b16 %v636, %v628
    %v805 = vpack.c.b16 %v637, %v629
    %v806 = vpack.c.b16 %v638, %v630
    %v807 = vpack.c.b16 %v647, %v639
    %v808 = vpack.c.b16 %v648, %v640
    %v809 = vpack.c.b16 %v649, %v641
    %v810 = vpack.c.b16 %v650, %v642
    %v811 = vpack.c.b16 %v651, %v643
    %v812 = vpack.c.b16 %v652, %v644
    %v813 = vpack.c.b16 %v653, %v645
    %v814 = vpack.c.b16 %v654, %v646
    %v815 = vpack.c.b16 %v663, %v655
    %v816 = vpack.c.b16 %v664, %v656
    %v817 = vpack.c.b16 %v665, %v657
    %v818 = vpack.c.b16 %v666, %v658
    %v819 = vpack.c.b16 %v667, %v659
    %v820 = vpack.c.b16 %v668, %v660
    %v821 = vpack.c.b16 %v669, %v661
    %v822 = vpack.c.b16 %v670, %v662
    %v823 = vpack.c.b16 %v679, %v671
    %v824 = vpack.c.b16 %v680, %v672
    %v825 = vpack.c.b16 %v681, %v673
    %v826 = vpack.c.b16 %v682, %v674
    %v827 = vpack.c.b16 %v683, %v675
    %v828 = vpack.c.b16 %v684, %v676
    %v829 = vpack.c.b16 %v685, %v677
    %v830 = vpack.c.b16 %v686, %v678
    %v831 = vpack.c.b16 %v695, %v687
    %v832 = vpack.c.b16 %v696, %v688
    %v833 = vpack.c.b16 %v697, %v689
    %v834 = vpack.c.b16 %v698, %v690
    %v835 = vpack.c.b16 %v699, %v691
    %v836 = vpack.c.b16 %v700, %v692
    %v837 = vpack.c.b16 %v701, %v693
    %v838 = vpack.c.b16 %v702, %v694
    %v839 = vpack.c.b16 %v711, %v703
    %v840 = vpack.c.b16 %v712, %v704
    %v841 = vpack.c.b16 %v713, %v705
    %v842 = vpack.c.b16 %v714, %v706
    %v843 = vpack.c.b16 %v715, %v707
    %v844 = vpack.c.b16 %v716, %v708
    %v845 = vpack.c.b16 %v717, %v709
    %v846 = vpack.c.b16 %v718, %v710
    %v1103 = vunpack.c.l.b16 %v207
    %v1104 = vunpack.c.l.b16 %v208
    %v1105 = vunpack.c.l.b16 %v209
    %v1106 = vunpack.c.l.b16 %v210
    %v1107 = vunpack.c.l.b16 %v211
    %v1108 = vunpack.c.l.b16 %v212
    %v1109 = vunpack.c.l.b16 %v213
    %v1110 = vunpack.c.l.b16 %v214
    %v1111 = vunpack.c.l.b16 %v215
    %v1112 = vunpack.c.l.b16 %v216
    %v1113 = vunpack.c.l.b16 %v217
    %v1114 = vunpack.c.l.b16 %v218
    %v1115 = vunpack.c.l.b16 %v219
    %v1116 = vunpack.c.l.b16 %v220
    %v1117 = vunpack.c.l.b16 %v221
    %v1118 = vunpack.c.l.b16 %v222
    %v1119 = vunpack.c.l.b16 %v223
    %v1120 = vunpack.c.l.b16 %v224
    %v1121 = vunpack.c.l.b16 %v225
    %v1122 = vunpack.c.l.b16 %v226
    %v1123 = vunpack.c.l.b16 %v227
    %v1124 = vunpack.c.l.b16 %v228
    %v1125 = vunpack.c.l.b16 %v229
    %v1126 = vunpack.c.l.b16 %v230
    %v1127 = vunpack.c.l.b16 %v231
    %v1128 = vunpack.c.l.b16 %v232
    %v1129 = vunpack.c.l.b16 %v233
    %v1130 = vunpack.c.l.b16 %v234
    %v1131 = vunpack.c.l.b16 %v235
    %v1132 = vunpack.c.l.b16 %v236
    %v1133 = vunpack.c.l.b16 %v237
    %v1134 = vunpack.c.l.b16 %v238
    %v1135 = vunpack.c.l.b16 %v239
    %v1136 = vunpack.c.l.b16 %v240
    %v1137 = vunpack.c.l.b16 %v241
    %v1138 = vunpack.c.l.b16 %v242
    %v1139 = vunpack.c.l.b16 %v243
    %v1140 = vunpack.c.l.b16 %v244
    %v1141 = vunpack.c.l.b16 %v245
    %v1142 = vunpack.c.l.b16 %v246
    %v1143 = vunpack.c.l.b16 %v247
    %v1144 = vunpack.c.l.b16 %v248
    %v1145 = vunpack.c.l.b16 %v249
    %v1146 = vunpack.c.l.b16 %v250
    %v1147 = vunpack.c.l.b16 %v251
    %v1148 = vunpack.c.l.b16 %v252
    %v1149 = vunpack.c.l.b16 %v253
    %v1150 = vunpack.c.l.b16 %v254
    %v1151 = vunpack.c.l.b16 %v255
    %v1152 = vunpack.c.l.b16 %v256
    %v1153 = vunpack.c.l.b16 %v257
    %v1154 = vunpack.c.l.b16 %v258
    %v1155 = vunpack.c.l.b16 %v259
    %v1156 = vunpack.c.l.b16 %v260
    %v1157 = vunpack.c.l.b16 %v261
    %v1158 = vunpack.c.l.b16 %v262
    %v1159 = vunpack.c.l.b16 %v263
    %v1160 = vunpack.c.l.b16 %v264
    %v1161 = vunpack.c.l.b16 %v265
    %v1162 = vunpack.c.l.b16 %v266
    %v1163 = vunpack.c.l.b16 %v267
    %v1164 = vunpack.c.l.b16 %v268
    %v1165 = vunpack.c.l.b16 %v269
    %v1166 = vunpack.c.l.b16 %v270
    %v1167 = vunpack.c.l.b16 %v271
    %v1168 = vunpack.c.l.b16 %v272
    %v1169 = vunpack.c.l.b16 %v273
    %v1170 = vunpack.c.l.b16 %v274
    %v1171 = vunpack.c.l.b16 %v275
    %v1172 = vunpack.c.l.b16 %v276
    %v1173 = vunpack.c.l.b16 %v277
    %v1174 = vunpack.c.l.b16 %v278
    %v1175 = vunpack.c.l.b16 %v279
    %v1176 = vunpack.c.l.b16 %v280
    %v1177 = vunpack.c.l.b16 %v281
    %v1178 = vunpack.c.l.b16 %v282
    %v1179 = vunpack.c.l.b16 %v283
    %v1180 = vunpack.c.l.b16 %v284
    %v1181 = vunpack.c.l.b16 %v285
    %v1182 = vunpack.c.l.b16 %v286
    %v1183 = vunpack.c.l.b16 %v287
    %v1184 = vunpack.c.l.b16 %v288
    %v1185 = vunpack.c.l.b16 %v289
    %v1186 = vunpack.c.l.b16 %v290
    %v1187 = vunpack.c.l.b16 %v291
    %v1188 = vunpack.c.l.b16 %v292
    %v1189 = vunpack.c.l.b16 %v293
    %v1190 = vunpack.c.l.b16 %v294
    %v1191 = vunpack.c.l.b16 %v295
    %v1192 = vunpack.c.l.b16 %v296
    %v1193 = vunpack.c.l.b16 %v297
    %v1194 = vunpack.c.l.b16 %v298
    %v1195 = vunpack.c.l.b16 %v299
    %v1196 = vunpack.c.l.b16 %v300
    %v1197 = vunpack.c.l.b16 %v301
    %v1198 = vunpack.c.l.b16 %v302
    %v1199 = vunpack.c.l.b16 %v303
    %v1200 = vunpack.c.l.b16 %v304
    %v1201 = vunpack.c.l.b16 %v305
    %v1202 = vunpack.c.l.b16 %v306
    %v1203 = vunpack.c.l.b16 %v307
    %v1204 = vunpack.c.l.b16 %v308
    %v1205 = vunpack.c.l.b16 %v309
    %v1206 = vunpack.c.l.b16 %v310
    %v1207 = vunpack.c.l.b16 %v311
    %v1208 = vunpack.c.l.b16 %v312
    %v1209 = vunpack.c.l.b16 %v313
    %v1210 = vunpack.c.l.b16 %v314
    %v1211 = vunpack.c.l.b16 %v315
    %v1212 = vunpack.c.l.b16 %v316
    %v1213 = vunpack.c.l.b16 %v317
    %v1214 = vunpack.c.l.b16 %v318
    %v1215 = vunpack.c.l.b16 %v319
    %v1216 = vunpack.c.l.b16 %v320
    %v1217 = vunpack.c.l.b16 %v321
    %v1218 = vunpack.c.l.b16 %v322
    %v1219 = vunpack.c.l.b16 %v323
    %v1220 = vunpack.c.l.b16 %v324
    %v1221 = vunpack.c.l.b16 %v325
    %v1222 = vunpack.c.l.b16 %v326
    %v1223 = vunpack.c.l.b16 %v327
    %v1224 = vunpack.c.l.b16 %v328
    %v1225 = vunpack.c.l.b16 %v329
    %v1226 = vunpack.c.l.b16 %v330
    %v1227 = vunpack.c.l.b16 %v331
    %v1228 = vunpack.c.l.b16 %v332
    %v1229 = vunpack.c.l.b16 %v333
    %v1230 = vunpack.c.l.b16 %v334
    %v1231 = vpack.c.b16 %v1104, %v1103
    %v1232 = vpack.c.b16 %v1106, %v1105
    %v1233 = vpack.c.b16 %v1108, %v1107
    %v1234 = vpack.c.b16 %v1110, %v1109
    %v1235 = vpack.c.b16 %v1112, %v1111
    %v1236 = vpack.c.b16 %v1114, %v1113
    %v1237 = vpack.c.b16 %v1116, %v1115
    %v1238 = vpack.c.b16 %v1118, %v1117
    %v1239 = vpack.c.b16 %v1120, %v1119
    %v1240 = vpack.c.b16 %v1122, %v1121
    %v1241 = vpack.c.b16 %v1124, %v1123
    %v1242 = vpack.c.b16 %v1126, %v1125
    %v1243 = vpack.c.b16 %v1128, %v1127
    %v1244 = vpack.c.b16 %v1130, %v1129
    %v1245 = vpack.c.b16 %v1132, %v1131
    %v1246 = vpack.c.b16 %v1134, %v1133
    %v1247 = vpack.c.b16 %v1136, %v1135
    %v1248 = vpack.c.b16 %v1138, %v1137
    %v1249 = vpack.c.b16 %v1140, %v1139
    %v1250 = vpack.c.b16 %v1142, %v1141
    %v1251 = vpack.c.b16 %v1144, %v1143
    %v1252 = vpack.c.b16 %v1146, %v1145
    %v1253 = vpack.c.b16 %v1148, %v1147
    %v1254 = vpack.c.b16 %v1150, %v1149
    %v1255 = vpack.c.b16 %v1152, %v1151
    %v1256 = vpack.c.b16 %v1154, %v1153
    %v1257 = vpack.c.b16 %v1156, %v1155
    %v1258 = vpack.c.b16 %v1158, %v1157
    %v1259 = vpack.c.b16 %v1160, %v1159
    %v1260 = vpack.c.b16 %v1162, %v1161
    %v1261 = vpack.c.b16 %v1164, %v1163
    %v1262 = vpack.c.b16 %v1166, %v1165
    %v1263 = vpack.c.b16 %v1168, %v1167
    %v1264 = vpack.c.b16 %v1170, %v1169
    %v1265 = vpack.c.b16 %v1172, %v1171
    %v1266 = vpack.c.b16 %v1174, %v1173
    %v1267 = vpack.c.b16 %v1176, %v1175
    %v1268 = vpack.c.b16 %v1178, %v1177
    %v1269 = vpack.c.b16 %v1180, %v1179
    %v1270 = vpack.c.b16 %v1182, %v1181
    %v1271 = vpack.c.b16 %v1184, %v1183
    %v1272 = vpack.c.b16 %v1186, %v1185
    %v1273 = vpack.c.b16 %v1188, %v1187
    %v1274 = vpack.c.b16 %v1190, %v1189
    %v1275 = vpack.c.b16 %v1192, %v1191
    %v1276 = vpack.c.b16 %v1194, %v1193
    %v1277 = vpack.c.b16 %v1196, %v1195
    %v1278 = vpack.c.b16 %v1198, %v1197
    %v1279 = vpack.c.b16 %v1200, %v1199
    %v1280 = vpack.c.b16 %v1202, %v1201
    %v1281 = vpack.c.b16 %v1204, %v1203
    %v1282 = vpack.c.b16 %v1206, %v1205
    %v1283 = vpack.c.b16 %v1208, %v1207
    %v1284 = vpack.c.b16 %v1210, %v1209
    %v1285 = vpack.c.b16 %v1212, %v1211
    %v1286 = vpack.c.b16 %v1214, %v1213
    %v1287 = vpack.c.b16 %v1216, %v1215
    %v1288 = vpack.c.b16 %v1218, %v1217
    %v1289 = vpack.c.b16 %v1220, %v1219
    %v1290 = vpack.c.b16 %v1222, %v1221
    %v1291 = vpack.c.b16 %v1224, %v1223
    %v1292 = vpack.c.b16 %v1226, %v1225
    %v1293 = vpack.c.b16 %v1228, %v1227
    %v1294 = vpack.c.b16 %v1230, %v1229
    %1359 = vmatpush.bf16.msra.mxu0 %v1238
    %1360 = vmatpush.bf16.msra.mxu0 %v1237
    %1361 = vmatpush.bf16.msra.mxu0 %v1236
    %1362 = vmatpush.bf16.msra.mxu0 %v1235
    %1363 = vmatpush.bf16.msra.mxu0 %v1234
    %1364 = vmatpush.bf16.msra.mxu0 %v1233
    %1365 = vmatpush.bf16.msra.mxu0 %v1232
    %1366 = vmatpush.bf16.msra.mxu0 %v1231
    %1367 = vmatmul.bf16.gmra.mxu0 %v719
    %v1368 = vpop.f32.mrf.mxu0
    %v1369 = vadd.f32 0.0, %v1368
    %v1370 = vpop.f32.mrf.mxu0
    %v1371 = vadd.f32 0.0, %v1370
    %1372 = vmatmul.bf16.gmra.mxu0 %v727
    %v1373 = vpop.f32.mrf.mxu0
    %v1374 = vadd.f32 0.0, %v1373
    %v1375 = vpop.f32.mrf.mxu0
    %v1376 = vadd.f32 0.0, %v1375
    %1377 = vmatmul.bf16.gmra.mxu0 %v735
    %v1378 = vpop.f32.mrf.mxu0
    %v1379 = vadd.f32 0.0, %v1378
    %v1380 = vpop.f32.mrf.mxu0
    %v1381 = vadd.f32 0.0, %v1380
    %1382 = vmatmul.bf16.gmra.mxu0 %v743
    %v1383 = vpop.f32.mrf.mxu0
    %v1384 = vadd.f32 0.0, %v1383
    %v1385 = vpop.f32.mrf.mxu0
    %v1386 = vadd.f32 0.0, %v1385
    %1387 = vmatmul.bf16.gmra.mxu0 %v751
    %v1388 = vpop.f32.mrf.mxu0
    %v1389 = vadd.f32 0.0, %v1388
    %v1390 = vpop.f32.mrf.mxu0
    %v1391 = vadd.f32 0.0, %v1390
    %1392 = vmatmul.bf16.gmra.mxu0 %v759
    %v1393 = vpop.f32.mrf.mxu0
    %v1394 = vadd.f32 0.0, %v1393
    %v1395 = vpop.f32.mrf.mxu0
    %v1396 = vadd.f32 0.0, %v1395
    %1397 = vmatmul.bf16.gmra.mxu0 %v767
    %v1398 = vpop.f32.mrf.mxu0
    %v1399 = vadd.f32 0.0, %v1398
    %v1400 = vpop.f32.mrf.mxu0
    %v1401 = vadd.f32 0.0, %v1400
    %1402 = vmatmul.bf16.gmra.mxu0 %v775
    %v1403 = vpop.f32.mrf.mxu0
    %v1404 = vadd.f32 0.0, %v1403
    %v1405 = vpop.f32.mrf.mxu0
    %v1406 = vadd.f32 0.0, %v1405
    %1407 = vmatmul.bf16.gmra.mxu0 %v783
    %v1408 = vpop.f32.mrf.mxu0
    %v1409 = vadd.f32 0.0, %v1408
    %v1410 = vpop.f32.mrf.mxu0
    %v1411 = vadd.f32 0.0, %v1410
    %1412 = vmatmul.bf16.gmra.mxu0 %v791
    %v1413 = vpop.f32.mrf.mxu0
    %v1414 = vadd.f32 0.0, %v1413
    %v1415 = vpop.f32.mrf.mxu0
    %v1416 = vadd.f32 0.0, %v1415
    %1417 = vmatmul.bf16.gmra.mxu0 %v799
    %v1418 = vpop.f32.mrf.mxu0
    %v1419 = vadd.f32 0.0, %v1418
    %v1420 = vpop.f32.mrf.mxu0
    %v1421 = vadd.f32 0.0, %v1420
    %1422 = vmatmul.bf16.gmra.mxu0 %v807
    %v1423 = vpop.f32.mrf.mxu0
    %v1424 = vadd.f32 0.0, %v1423
    %v1425 = vpop.f32.mrf.mxu0
    %v1426 = vadd.f32 0.0, %v1425
    %1427 = vmatmul.bf16.gmra.mxu0 %v815
    %v1428 = vpop.f32.mrf.mxu0
    %v1429 = vadd.f32 0.0, %v1428
    %v1430 = vpop.f32.mrf.mxu0
    %v1431 = vadd.f32 0.0, %v1430
    %1432 = vmatmul.bf16.gmra.mxu0 %v823
    %v1433 = vpop.f32.mrf.mxu0
    %v1434 = vadd.f32 0.0, %v1433
    %v1435 = vpop.f32.mrf.mxu0
    %v1436 = vadd.f32 0.0, %v1435
    %1437 = vmatmul.bf16.gmra.mxu0 %v831
    %v1438 = vpop.f32.mrf.mxu0
    %v1439 = vadd.f32 0.0, %v1438
    %v1440 = vpop.f32.mrf.mxu0
    %v1441 = vadd.f32 0.0, %v1440
    %1442 = vmatmul.bf16.gmra.mxu0 %v839
    %v1443 = vpop.f32.mrf.mxu0
    %v1444 = vadd.f32 0.0, %v1443
    %v1445 = vpop.f32.mrf.mxu0
    %v1446 = vadd.f32 0.0, %v1445
    %1447 = vdwg.mxu0
    %1448 = vmatpush.bf16.msra.mxu0 %v1246
    %1449 = vmatpush.bf16.msra.mxu0 %v1245
    %1450 = vmatpush.bf16.msra.mxu0 %v1244
    %1451 = vmatpush.bf16.msra.mxu0 %v1243
    %1452 = vmatpush.bf16.msra.mxu0 %v1242
    %1453 = vmatpush.bf16.msra.mxu0 %v1241
    %1454 = vmatpush.bf16.msra.mxu0 %v1240
    %1455 = vmatpush.bf16.msra.mxu0 %v1239
    %1456 = vmatmul.bf16.gmra.mxu0 %v720
    %v1457 = vpop.f32.mrf.mxu0
    %v1458 = vadd.f32 %v1369, %v1457
    %v1459 = vpop.f32.mrf.mxu0
    %v1460 = vadd.f32 %v1371, %v1459
    %1461 = vmatmul.bf16.gmra.mxu0 %v728
    %v1462 = vpop.f32.mrf.mxu0
    %v1463 = vadd.f32 %v1374, %v1462
    %v1464 = vpop.f32.mrf.mxu0
    %v1465 = vadd.f32 %v1376, %v1464
    %1466 = vmatmul.bf16.gmra.mxu0 %v736
    %v1467 = vpop.f32.mrf.mxu0
    %v1468 = vadd.f32 %v1379, %v1467
    %v1469 = vpop.f32.mrf.mxu0
    %v1470 = vadd.f32 %v1381, %v1469
    %1471 = vmatmul.bf16.gmra.mxu0 %v744
    %v1472 = vpop.f32.mrf.mxu0
    %v1473 = vadd.f32 %v1384, %v1472
    %v1474 = vpop.f32.mrf.mxu0
    %v1475 = vadd.f32 %v1386, %v1474
    %1476 = vmatmul.bf16.gmra.mxu0 %v752
    %v1477 = vpop.f32.mrf.mxu0
    %v1478 = vadd.f32 %v1389, %v1477
    %v1479 = vpop.f32.mrf.mxu0
    %v1480 = vadd.f32 %v1391, %v1479
    %1481 = vmatmul.bf16.gmra.mxu0 %v760
    %v1482 = vpop.f32.mrf.mxu0
    %v1483 = vadd.f32 %v1394, %v1482
    %v1484 = vpop.f32.mrf.mxu0
    %v1485 = vadd.f32 %v1396, %v1484
    %1486 = vmatmul.bf16.gmra.mxu0 %v768
    %v1487 = vpop.f32.mrf.mxu0
    %v1488 = vadd.f32 %v1399, %v1487
    %v1489 = vpop.f32.mrf.mxu0
    %v1490 = vadd.f32 %v1401, %v1489
    %1491 = vmatmul.bf16.gmra.mxu0 %v776
    %v1492 = vpop.f32.mrf.mxu0
    %v1493 = vadd.f32 %v1404, %v1492
    %v1494 = vpop.f32.mrf.mxu0
    %v1495 = vadd.f32 %v1406, %v1494
    %1496 = vmatmul.bf16.gmra.mxu0 %v784
    %v1497 = vpop.f32.mrf.mxu0
    %v1498 = vadd.f32 %v1409, %v1497
    %v1499 = vpop.f32.mrf.mxu0
    %v1500 = vadd.f32 %v1411, %v1499
    %1501 = vmatmul.bf16.gmra.mxu0 %v792
    %v1502 = vpop.f32.mrf.mxu0
    %v1503 = vadd.f32 %v1414, %v1502
    %v1504 = vpop.f32.mrf.mxu0
    %v1505 = vadd.f32 %v1416, %v1504
    %1506 = vmatmul.bf16.gmra.mxu0 %v800
    %v1507 = vpop.f32.mrf.mxu0
    %v1508 = vadd.f32 %v1419, %v1507
    %v1509 = vpop.f32.mrf.mxu0
    %v1510 = vadd.f32 %v1421, %v1509
    %1511 = vmatmul.bf16.gmra.mxu0 %v808
    %v1512 = vpop.f32.mrf.mxu0
    %v1513 = vadd.f32 %v1424, %v1512
    %v1514 = vpop.f32.mrf.mxu0
    %v1515 = vadd.f32 %v1426, %v1514
    %1516 = vmatmul.bf16.gmra.mxu0 %v816
    %v1517 = vpop.f32.mrf.mxu0
    %v1518 = vadd.f32 %v1429, %v1517
    %v1519 = vpop.f32.mrf.mxu0
    %v1520 = vadd.f32 %v1431, %v1519
    %1521 = vmatmul.bf16.gmra.mxu0 %v824
    %v1522 = vpop.f32.mrf.mxu0
    %v1523 = vadd.f32 %v1434, %v1522
    %v1524 = vpop.f32.mrf.mxu0
    %v1525 = vadd.f32 %v1436, %v1524
    %1526 = vmatmul.bf16.gmra.mxu0 %v832
    %v1527 = vpop.f32.mrf.mxu0
    %v1528 = vadd.f32 %v1439, %v1527
    %v1529 = vpop.f32.mrf.mxu0
    %v1530 = vadd.f32 %v1441, %v1529
    %1531 = vmatmul.bf16.gmra.mxu0 %v840
    %v1532 = vpop.f32.mrf.mxu0
    %v1533 = vadd.f32 %v1444, %v1532
    %v1534 = vpop.f32.mrf.mxu0
    %v1535 = vadd.f32 %v1446, %v1534
    %1536 = vdwg.mxu0
    %1537 = vmatpush.bf16.msra.mxu0 %v1254
    %1538 = vmatpush.bf16.msra.mxu0 %v1253
    %1539 = vmatpush.bf16.msra.mxu0 %v1252
    %1540 = vmatpush.bf16.msra.mxu0 %v1251
    %1541 = vmatpush.bf16.msra.mxu0 %v1250
    %1542 = vmatpush.bf16.msra.mxu0 %v1249
    %1543 = vmatpush.bf16.msra.mxu0 %v1248
    %1544 = vmatpush.bf16.msra.mxu0 %v1247
    %1545 = vmatmul.bf16.gmra.mxu0 %v721
    %v1546 = vpop.f32.mrf.mxu0
    %v1547 = vadd.f32 %v1458, %v1546
    %v1548 = vpop.f32.mrf.mxu0
    %v1549 = vadd.f32 %v1460, %v1548
    %1550 = vmatmul.bf16.gmra.mxu0 %v729
    %v1551 = vpop.f32.mrf.mxu0
    %v1552 = vadd.f32 %v1463, %v1551
    %v1553 = vpop.f32.mrf.mxu0
    %v1554 = vadd.f32 %v1465, %v1553
    %1555 = vmatmul.bf16.gmra.mxu0 %v737
    %v1556 = vpop.f32.mrf.mxu0
    %v1557 = vadd.f32 %v1468, %v1556
    %v1558 = vpop.f32.mrf.mxu0
    %v1559 = vadd.f32 %v1470, %v1558
    %1560 = vmatmul.bf16.gmra.mxu0 %v745
    %v1561 = vpop.f32.mrf.mxu0
    %v1562 = vadd.f32 %v1473, %v1561
    %v1563 = vpop.f32.mrf.mxu0
    %v1564 = vadd.f32 %v1475, %v1563
    %1565 = vmatmul.bf16.gmra.mxu0 %v753
    %v1566 = vpop.f32.mrf.mxu0
    %v1567 = vadd.f32 %v1478, %v1566
    %v1568 = vpop.f32.mrf.mxu0
    %v1569 = vadd.f32 %v1480, %v1568
    %1570 = vmatmul.bf16.gmra.mxu0 %v761
    %v1571 = vpop.f32.mrf.mxu0
    %v1572 = vadd.f32 %v1483, %v1571
    %v1573 = vpop.f32.mrf.mxu0
    %v1574 = vadd.f32 %v1485, %v1573
    %1575 = vmatmul.bf16.gmra.mxu0 %v769
    %v1576 = vpop.f32.mrf.mxu0
    %v1577 = vadd.f32 %v1488, %v1576
    %v1578 = vpop.f32.mrf.mxu0
    %v1579 = vadd.f32 %v1490, %v1578
    %1580 = vmatmul.bf16.gmra.mxu0 %v777
    %v1581 = vpop.f32.mrf.mxu0
    %v1582 = vadd.f32 %v1493, %v1581
    %v1583 = vpop.f32.mrf.mxu0
    %v1584 = vadd.f32 %v1495, %v1583
    %1585 = vmatmul.bf16.gmra.mxu0 %v785
    %v1586 = vpop.f32.mrf.mxu0
    %v1587 = vadd.f32 %v1498, %v1586
    %v1588 = vpop.f32.mrf.mxu0
    %v1589 = vadd.f32 %v1500, %v1588
    %1590 = vmatmul.bf16.gmra.mxu0 %v793
    %v1591 = vpop.f32.mrf.mxu0
    %v1592 = vadd.f32 %v1503, %v1591
    %v1593 = vpop.f32.mrf.mxu0
    %v1594 = vadd.f32 %v1505, %v1593
    %1595 = vmatmul.bf16.gmra.mxu0 %v801
    %v1596 = vpop.f32.mrf.mxu0
    %v1597 = vadd.f32 %v1508, %v1596
    %v1598 = vpop.f32.mrf.mxu0
    %v1599 = vadd.f32 %v1510, %v1598
    %1600 = vmatmul.bf16.gmra.mxu0 %v809
    %v1601 = vpop.f32.mrf.mxu0
    %v1602 = vadd.f32 %v1513, %v1601
    %v1603 = vpop.f32.mrf.mxu0
    %v1604 = vadd.f32 %v1515, %v1603
    %1605 = vmatmul.bf16.gmra.mxu0 %v817
    %v1606 = vpop.f32.mrf.mxu0
    %v1607 = vadd.f32 %v1518, %v1606
    %v1608 = vpop.f32.mrf.mxu0
    %v1609 = vadd.f32 %v1520, %v1608
    %1610 = vmatmul.bf16.gmra.mxu0 %v825
    %v1611 = vpop.f32.mrf.mxu0
    %v1612 = vadd.f32 %v1523, %v1611
    %v1613 = vpop.f32.mrf.mxu0
    %v1614 = vadd.f32 %v1525, %v1613
    %1615 = vmatmul.bf16.gmra.mxu0 %v833
    %v1616 = vpop.f32.mrf.mxu0
    %v1617 = vadd.f32 %v1528, %v1616
    %v1618 = vpop.f32.mrf.mxu0
    %v1619 = vadd.f32 %v1530, %v1618
    %1620 = vmatmul.bf16.gmra.mxu0 %v841
    %v1621 = vpop.f32.mrf.mxu0
    %v1622 = vadd.f32 %v1533, %v1621
    %v1623 = vpop.f32.mrf.mxu0
    %v1624 = vadd.f32 %v1535, %v1623
    %1625 = vdwg.mxu0
    %1626 = vmatpush.bf16.msra.mxu0 %v1262
    %1627 = vmatpush.bf16.msra.mxu0 %v1261
    %1628 = vmatpush.bf16.msra.mxu0 %v1260
    %1629 = vmatpush.bf16.msra.mxu0 %v1259
    %1630 = vmatpush.bf16.msra.mxu0 %v1258
    %1631 = vmatpush.bf16.msra.mxu0 %v1257
    %1632 = vmatpush.bf16.msra.mxu0 %v1256
    %1633 = vmatpush.bf16.msra.mxu0 %v1255
    %1634 = vmatmul.bf16.gmra.mxu0 %v722
    %v1635 = vpop.f32.mrf.mxu0
    %v1636 = vadd.f32 %v1547, %v1635
    %v1637 = vpop.f32.mrf.mxu0
    %v1638 = vadd.f32 %v1549, %v1637
    %1639 = vmatmul.bf16.gmra.mxu0 %v730
    %v1640 = vpop.f32.mrf.mxu0
    %v1641 = vadd.f32 %v1552, %v1640
    %v1642 = vpop.f32.mrf.mxu0
    %v1643 = vadd.f32 %v1554, %v1642
    %1644 = vmatmul.bf16.gmra.mxu0 %v738
    %v1645 = vpop.f32.mrf.mxu0
    %v1646 = vadd.f32 %v1557, %v1645
    %v1647 = vpop.f32.mrf.mxu0
    %v1648 = vadd.f32 %v1559, %v1647
    %1649 = vmatmul.bf16.gmra.mxu0 %v746
    %v1650 = vpop.f32.mrf.mxu0
    %v1651 = vadd.f32 %v1562, %v1650
    %v1652 = vpop.f32.mrf.mxu0
    %v1653 = vadd.f32 %v1564, %v1652
    %1654 = vmatmul.bf16.gmra.mxu0 %v754
    %v1655 = vpop.f32.mrf.mxu0
    %v1656 = vadd.f32 %v1567, %v1655
    %v1657 = vpop.f32.mrf.mxu0
    %v1658 = vadd.f32 %v1569, %v1657
    %1659 = vmatmul.bf16.gmra.mxu0 %v762
    %v1660 = vpop.f32.mrf.mxu0
    %v1661 = vadd.f32 %v1572, %v1660
    %v1662 = vpop.f32.mrf.mxu0
    %v1663 = vadd.f32 %v1574, %v1662
    %1664 = vmatmul.bf16.gmra.mxu0 %v770
    %v1665 = vpop.f32.mrf.mxu0
    %v1666 = vadd.f32 %v1577, %v1665
    %v1667 = vpop.f32.mrf.mxu0
    %v1668 = vadd.f32 %v1579, %v1667
    %1669 = vmatmul.bf16.gmra.mxu0 %v778
    %v1670 = vpop.f32.mrf.mxu0
    %v1671 = vadd.f32 %v1582, %v1670
    %v1672 = vpop.f32.mrf.mxu0
    %v1673 = vadd.f32 %v1584, %v1672
    %1674 = vmatmul.bf16.gmra.mxu0 %v786
    %v1675 = vpop.f32.mrf.mxu0
    %v1676 = vadd.f32 %v1587, %v1675
    %v1677 = vpop.f32.mrf.mxu0
    %v1678 = vadd.f32 %v1589, %v1677
    %1679 = vmatmul.bf16.gmra.mxu0 %v794
    %v1680 = vpop.f32.mrf.mxu0
    %v1681 = vadd.f32 %v1592, %v1680
    %v1682 = vpop.f32.mrf.mxu0
    %v1683 = vadd.f32 %v1594, %v1682
    %1684 = vmatmul.bf16.gmra.mxu0 %v802
    %v1685 = vpop.f32.mrf.mxu0
    %v1686 = vadd.f32 %v1597, %v1685
    %v1687 = vpop.f32.mrf.mxu0
    %v1688 = vadd.f32 %v1599, %v1687
    %1689 = vmatmul.bf16.gmra.mxu0 %v810
    %v1690 = vpop.f32.mrf.mxu0
    %v1691 = vadd.f32 %v1602, %v1690
    %v1692 = vpop.f32.mrf.mxu0
    %v1693 = vadd.f32 %v1604, %v1692
    %1694 = vmatmul.bf16.gmra.mxu0 %v818
    %v1695 = vpop.f32.mrf.mxu0
    %v1696 = vadd.f32 %v1607, %v1695
    %v1697 = vpop.f32.mrf.mxu0
    %v1698 = vadd.f32 %v1609, %v1697
    %1699 = vmatmul.bf16.gmra.mxu0 %v826
    %v1700 = vpop.f32.mrf.mxu0
    %v1701 = vadd.f32 %v1612, %v1700
    %v1702 = vpop.f32.mrf.mxu0
    %v1703 = vadd.f32 %v1614, %v1702
    %1704 = vmatmul.bf16.gmra.mxu0 %v834
    %v1705 = vpop.f32.mrf.mxu0
    %v1706 = vadd.f32 %v1617, %v1705
    %v1707 = vpop.f32.mrf.mxu0
    %v1708 = vadd.f32 %v1619, %v1707
    %1709 = vmatmul.bf16.gmra.mxu0 %v842
    %v1710 = vpop.f32.mrf.mxu0
    %v1711 = vadd.f32 %v1622, %v1710
    %v1712 = vpop.f32.mrf.mxu0
    %v1713 = vadd.f32 %v1624, %v1712
    %1714 = vdwg.mxu0
    %1715 = vmatpush.bf16.msra.mxu0 %v1270
    %1716 = vmatpush.bf16.msra.mxu0 %v1269
    %1717 = vmatpush.bf16.msra.mxu0 %v1268
    %1718 = vmatpush.bf16.msra.mxu0 %v1267
    %1719 = vmatpush.bf16.msra.mxu0 %v1266
    %1720 = vmatpush.bf16.msra.mxu0 %v1265
    %1721 = vmatpush.bf16.msra.mxu0 %v1264
    %1722 = vmatpush.bf16.msra.mxu0 %v1263
    %1723 = vmatmul.bf16.gmra.mxu0 %v723
    %v1724 = vpop.f32.mrf.mxu0
    %v1725 = vadd.f32 %v1636, %v1724
    %v1726 = vpop.f32.mrf.mxu0
    %v1727 = vadd.f32 %v1638, %v1726
    %1728 = vmatmul.bf16.gmra.mxu0 %v731
    %v1729 = vpop.f32.mrf.mxu0
    %v1730 = vadd.f32 %v1641, %v1729
    %v1731 = vpop.f32.mrf.mxu0
    %v1732 = vadd.f32 %v1643, %v1731
    %1733 = vmatmul.bf16.gmra.mxu0 %v739
    %v1734 = vpop.f32.mrf.mxu0
    %v1735 = vadd.f32 %v1646, %v1734
    %v1736 = vpop.f32.mrf.mxu0
    %v1737 = vadd.f32 %v1648, %v1736
    %1738 = vmatmul.bf16.gmra.mxu0 %v747
    %v1739 = vpop.f32.mrf.mxu0
    %v1740 = vadd.f32 %v1651, %v1739
    %v1741 = vpop.f32.mrf.mxu0
    %v1742 = vadd.f32 %v1653, %v1741
    %1743 = vmatmul.bf16.gmra.mxu0 %v755
    %v1744 = vpop.f32.mrf.mxu0
    %v1745 = vadd.f32 %v1656, %v1744
    %v1746 = vpop.f32.mrf.mxu0
    %v1747 = vadd.f32 %v1658, %v1746
    %1748 = vmatmul.bf16.gmra.mxu0 %v763
    %v1749 = vpop.f32.mrf.mxu0
    %v1750 = vadd.f32 %v1661, %v1749
    %v1751 = vpop.f32.mrf.mxu0
    %v1752 = vadd.f32 %v1663, %v1751
    %1753 = vmatmul.bf16.gmra.mxu0 %v771
    %v1754 = vpop.f32.mrf.mxu0
    %v1755 = vadd.f32 %v1666, %v1754
    %v1756 = vpop.f32.mrf.mxu0
    %v1757 = vadd.f32 %v1668, %v1756
    %1758 = vmatmul.bf16.gmra.mxu0 %v779
    %v1759 = vpop.f32.mrf.mxu0
    %v1760 = vadd.f32 %v1671, %v1759
    %v1761 = vpop.f32.mrf.mxu0
    %v1762 = vadd.f32 %v1673, %v1761
    %1763 = vmatmul.bf16.gmra.mxu0 %v787
    %v1764 = vpop.f32.mrf.mxu0
    %v1765 = vadd.f32 %v1676, %v1764
    %v1766 = vpop.f32.mrf.mxu0
    %v1767 = vadd.f32 %v1678, %v1766
    %1768 = vmatmul.bf16.gmra.mxu0 %v795
    %v1769 = vpop.f32.mrf.mxu0
    %v1770 = vadd.f32 %v1681, %v1769
    %v1771 = vpop.f32.mrf.mxu0
    %v1772 = vadd.f32 %v1683, %v1771
    %1773 = vmatmul.bf16.gmra.mxu0 %v803
    %v1774 = vpop.f32.mrf.mxu0
    %v1775 = vadd.f32 %v1686, %v1774
    %v1776 = vpop.f32.mrf.mxu0
    %v1777 = vadd.f32 %v1688, %v1776
    %1778 = vmatmul.bf16.gmra.mxu0 %v811
    %v1779 = vpop.f32.mrf.mxu0
    %v1780 = vadd.f32 %v1691, %v1779
    %v1781 = vpop.f32.mrf.mxu0
    %v1782 = vadd.f32 %v1693, %v1781
    %1783 = vmatmul.bf16.gmra.mxu0 %v819
    %v1784 = vpop.f32.mrf.mxu0
    %v1785 = vadd.f32 %v1696, %v1784
    %v1786 = vpop.f32.mrf.mxu0
    %v1787 = vadd.f32 %v1698, %v1786
    %1788 = vmatmul.bf16.gmra.mxu0 %v827
    %v1789 = vpop.f32.mrf.mxu0
    %v1790 = vadd.f32 %v1701, %v1789
    %v1791 = vpop.f32.mrf.mxu0
    %v1792 = vadd.f32 %v1703, %v1791
    %1793 = vmatmul.bf16.gmra.mxu0 %v835
    %v1794 = vpop.f32.mrf.mxu0
    %v1795 = vadd.f32 %v1706, %v1794
    %v1796 = vpop.f32.mrf.mxu0
    %v1797 = vadd.f32 %v1708, %v1796
    %1798 = vmatmul.bf16.gmra.mxu0 %v843
    %v1799 = vpop.f32.mrf.mxu0
    %v1800 = vadd.f32 %v1711, %v1799
    %v1801 = vpop.f32.mrf.mxu0
    %v1802 = vadd.f32 %v1713, %v1801
    %1803 = vdwg.mxu0
    %1804 = vmatpush.bf16.msra.mxu0 %v1278
    %1805 = vmatpush.bf16.msra.mxu0 %v1277
    %1806 = vmatpush.bf16.msra.mxu0 %v1276
    %1807 = vmatpush.bf16.msra.mxu0 %v1275
    %1808 = vmatpush.bf16.msra.mxu0 %v1274
    %1809 = vmatpush.bf16.msra.mxu0 %v1273
    %1810 = vmatpush.bf16.msra.mxu0 %v1272
    %1811 = vmatpush.bf16.msra.mxu0 %v1271
    %1812 = vmatmul.bf16.gmra.mxu0 %v724
    %v1813 = vpop.f32.mrf.mxu0
    %v1814 = vadd.f32 %v1725, %v1813
    %v1815 = vpop.f32.mrf.mxu0
    %v1816 = vadd.f32 %v1727, %v1815
    %1817 = vmatmul.bf16.gmra.mxu0 %v732
    %v1818 = vpop.f32.mrf.mxu0
    %v1819 = vadd.f32 %v1730, %v1818
    %v1820 = vpop.f32.mrf.mxu0
    %v1821 = vadd.f32 %v1732, %v1820
    %1822 = vmatmul.bf16.gmra.mxu0 %v740
    %v1823 = vpop.f32.mrf.mxu0
    %v1824 = vadd.f32 %v1735, %v1823
    %v1825 = vpop.f32.mrf.mxu0
    %v1826 = vadd.f32 %v1737, %v1825
    %1827 = vmatmul.bf16.gmra.mxu0 %v748
    %v1828 = vpop.f32.mrf.mxu0
    %v1829 = vadd.f32 %v1740, %v1828
    %v1830 = vpop.f32.mrf.mxu0
    %v1831 = vadd.f32 %v1742, %v1830
    %1832 = vmatmul.bf16.gmra.mxu0 %v756
    %v1833 = vpop.f32.mrf.mxu0
    %v1834 = vadd.f32 %v1745, %v1833
    %v1835 = vpop.f32.mrf.mxu0
    %v1836 = vadd.f32 %v1747, %v1835
    %1837 = vmatmul.bf16.gmra.mxu0 %v764
    %v1838 = vpop.f32.mrf.mxu0
    %v1839 = vadd.f32 %v1750, %v1838
    %v1840 = vpop.f32.mrf.mxu0
    %v1841 = vadd.f32 %v1752, %v1840
    %1842 = vmatmul.bf16.gmra.mxu0 %v772
    %v1843 = vpop.f32.mrf.mxu0
    %v1844 = vadd.f32 %v1755, %v1843
    %v1845 = vpop.f32.mrf.mxu0
    %v1846 = vadd.f32 %v1757, %v1845
    %1847 = vmatmul.bf16.gmra.mxu0 %v780
    %v1848 = vpop.f32.mrf.mxu0
    %v1849 = vadd.f32 %v1760, %v1848
    %v1850 = vpop.f32.mrf.mxu0
    %v1851 = vadd.f32 %v1762, %v1850
    %1852 = vmatmul.bf16.gmra.mxu0 %v788
    %v1853 = vpop.f32.mrf.mxu0
    %v1854 = vadd.f32 %v1765, %v1853
    %v1855 = vpop.f32.mrf.mxu0
    %v1856 = vadd.f32 %v1767, %v1855
    %1857 = vmatmul.bf16.gmra.mxu0 %v796
    %v1858 = vpop.f32.mrf.mxu0
    %v1859 = vadd.f32 %v1770, %v1858
    %v1860 = vpop.f32.mrf.mxu0
    %v1861 = vadd.f32 %v1772, %v1860
    %1862 = vmatmul.bf16.gmra.mxu0 %v804
    %v1863 = vpop.f32.mrf.mxu0
    %v1864 = vadd.f32 %v1775, %v1863
    %v1865 = vpop.f32.mrf.mxu0
    %v1866 = vadd.f32 %v1777, %v1865
    %1867 = vmatmul.bf16.gmra.mxu0 %v812
    %v1868 = vpop.f32.mrf.mxu0
    %v1869 = vadd.f32 %v1780, %v1868
    %v1870 = vpop.f32.mrf.mxu0
    %v1871 = vadd.f32 %v1782, %v1870
    %1872 = vmatmul.bf16.gmra.mxu0 %v820
    %v1873 = vpop.f32.mrf.mxu0
    %v1874 = vadd.f32 %v1785, %v1873
    %v1875 = vpop.f32.mrf.mxu0
    %v1876 = vadd.f32 %v1787, %v1875
    %1877 = vmatmul.bf16.gmra.mxu0 %v828
    %v1878 = vpop.f32.mrf.mxu0
    %v1879 = vadd.f32 %v1790, %v1878
    %v1880 = vpop.f32.mrf.mxu0
    %v1881 = vadd.f32 %v1792, %v1880
    %1882 = vmatmul.bf16.gmra.mxu0 %v836
    %v1883 = vpop.f32.mrf.mxu0
    %v1884 = vadd.f32 %v1795, %v1883
    %v1885 = vpop.f32.mrf.mxu0
    %v1886 = vadd.f32 %v1797, %v1885
    %1887 = vmatmul.bf16.gmra.mxu0 %v844
    %v1888 = vpop.f32.mrf.mxu0
    %v1889 = vadd.f32 %v1800, %v1888
    %v1890 = vpop.f32.mrf.mxu0
    %v1891 = vadd.f32 %v1802, %v1890
    %1892 = vdwg.mxu0
    %1893 = vmatpush.bf16.msra.mxu0 %v1286
    %1894 = vmatpush.bf16.msra.mxu0 %v1285
    %1895 = vmatpush.bf16.msra.mxu0 %v1284
    %1896 = vmatpush.bf16.msra.mxu0 %v1283
    %1897 = vmatpush.bf16.msra.mxu0 %v1282
    %1898 = vmatpush.bf16.msra.mxu0 %v1281
    %1899 = vmatpush.bf16.msra.mxu0 %v1280
    %1900 = vmatpush.bf16.msra.mxu0 %v1279
    %1901 = vmatmul.bf16.gmra.mxu0 %v725
    %v1902 = vpop.f32.mrf.mxu0
    %v1903 = vadd.f32 %v1814, %v1902
    %v1904 = vpop.f32.mrf.mxu0
    %v1905 = vadd.f32 %v1816, %v1904
    %1906 = vmatmul.bf16.gmra.mxu0 %v733
    %v1907 = vpop.f32.mrf.mxu0
    %v1908 = vadd.f32 %v1819, %v1907
    %v1909 = vpop.f32.mrf.mxu0
    %v1910 = vadd.f32 %v1821, %v1909
    %1911 = vmatmul.bf16.gmra.mxu0 %v741
    %v1912 = vpop.f32.mrf.mxu0
    %v1913 = vadd.f32 %v1824, %v1912
    %v1914 = vpop.f32.mrf.mxu0
    %v1915 = vadd.f32 %v1826, %v1914
    %1916 = vmatmul.bf16.gmra.mxu0 %v749
    %v1917 = vpop.f32.mrf.mxu0
    %v1918 = vadd.f32 %v1829, %v1917
    %v1919 = vpop.f32.mrf.mxu0
    %v1920 = vadd.f32 %v1831, %v1919
    %1921 = vmatmul.bf16.gmra.mxu0 %v757
    %v1922 = vpop.f32.mrf.mxu0
    %v1923 = vadd.f32 %v1834, %v1922
    %v1924 = vpop.f32.mrf.mxu0
    %v1925 = vadd.f32 %v1836, %v1924
    %1926 = vmatmul.bf16.gmra.mxu0 %v765
    %v1927 = vpop.f32.mrf.mxu0
    %v1928 = vadd.f32 %v1839, %v1927
    %v1929 = vpop.f32.mrf.mxu0
    %v1930 = vadd.f32 %v1841, %v1929
    %1931 = vmatmul.bf16.gmra.mxu0 %v773
    %v1932 = vpop.f32.mrf.mxu0
    %v1933 = vadd.f32 %v1844, %v1932
    %v1934 = vpop.f32.mrf.mxu0
    %v1935 = vadd.f32 %v1846, %v1934
    %1936 = vmatmul.bf16.gmra.mxu0 %v781
    %v1937 = vpop.f32.mrf.mxu0
    %v1938 = vadd.f32 %v1849, %v1937
    %v1939 = vpop.f32.mrf.mxu0
    %v1940 = vadd.f32 %v1851, %v1939
    %1941 = vmatmul.bf16.gmra.mxu0 %v789
    %v1942 = vpop.f32.mrf.mxu0
    %v1943 = vadd.f32 %v1854, %v1942
    %v1944 = vpop.f32.mrf.mxu0
    %v1945 = vadd.f32 %v1856, %v1944
    %1946 = vmatmul.bf16.gmra.mxu0 %v797
    %v1947 = vpop.f32.mrf.mxu0
    %v1948 = vadd.f32 %v1859, %v1947
    %v1949 = vpop.f32.mrf.mxu0
    %v1950 = vadd.f32 %v1861, %v1949
    %1951 = vmatmul.bf16.gmra.mxu0 %v805
    %v1952 = vpop.f32.mrf.mxu0
    %v1953 = vadd.f32 %v1864, %v1952
    %v1954 = vpop.f32.mrf.mxu0
    %v1955 = vadd.f32 %v1866, %v1954
    %1956 = vmatmul.bf16.gmra.mxu0 %v813
    %v1957 = vpop.f32.mrf.mxu0
    %v1958 = vadd.f32 %v1869, %v1957
    %v1959 = vpop.f32.mrf.mxu0
    %v1960 = vadd.f32 %v1871, %v1959
    %1961 = vmatmul.bf16.gmra.mxu0 %v821
    %v1962 = vpop.f32.mrf.mxu0
    %v1963 = vadd.f32 %v1874, %v1962
    %v1964 = vpop.f32.mrf.mxu0
    %v1965 = vadd.f32 %v1876, %v1964
    %1966 = vmatmul.bf16.gmra.mxu0 %v829
    %v1967 = vpop.f32.mrf.mxu0
    %v1968 = vadd.f32 %v1879, %v1967
    %v1969 = vpop.f32.mrf.mxu0
    %v1970 = vadd.f32 %v1881, %v1969
    %1971 = vmatmul.bf16.gmra.mxu0 %v837
    %v1972 = vpop.f32.mrf.mxu0
    %v1973 = vadd.f32 %v1884, %v1972
    %v1974 = vpop.f32.mrf.mxu0
    %v1975 = vadd.f32 %v1886, %v1974
    %1976 = vmatmul.bf16.gmra.mxu0 %v845
    %v1977 = vpop.f32.mrf.mxu0
    %v1978 = vadd.f32 %v1889, %v1977
    %v1979 = vpop.f32.mrf.mxu0
    %v1980 = vadd.f32 %v1891, %v1979
    %1981 = vdwg.mxu0
    %1982 = vmatpush.bf16.msra.mxu0 %v1294
    %1983 = vmatpush.bf16.msra.mxu0 %v1293
    %1984 = vmatpush.bf16.msra.mxu0 %v1292
    %1985 = vmatpush.bf16.msra.mxu0 %v1291
    %1986 = vmatpush.bf16.msra.mxu0 %v1290
    %1987 = vmatpush.bf16.msra.mxu0 %v1289
    %1988 = vmatpush.bf16.msra.mxu0 %v1288
    %1989 = vmatpush.bf16.msra.mxu0 %v1287
    %1990 = vmatmul.bf16.gmra.mxu0 %v726
    %v1991 = vpop.f32.mrf.mxu0
    %v1992 = vadd.f32 %v1903, %v1991
    %v1993 = vpop.f32.mrf.mxu0
    %v1994 = vadd.f32 %v1905, %v1993
    %1995 = vmatmul.bf16.gmra.mxu0 %v734
    %v1996 = vpop.f32.mrf.mxu0
    %v1997 = vadd.f32 %v1908, %v1996
    %v1998 = vpop.f32.mrf.mxu0
    %v1999 = vadd.f32 %v1910, %v1998
    %2000 = vmatmul.bf16.gmra.mxu0 %v742
    %v2001 = vpop.f32.mrf.mxu0
    %v2002 = vadd.f32 %v1913, %v2001
    %v2003 = vpop.f32.mrf.mxu0
    %v2004 = vadd.f32 %v1915, %v2003
    %2005 = vmatmul.bf16.gmra.mxu0 %v750
    %v2006 = vpop.f32.mrf.mxu0
    %v2007 = vadd.f32 %v1918, %v2006
    %v2008 = vpop.f32.mrf.mxu0
    %v2009 = vadd.f32 %v1920, %v2008
    %2010 = vmatmul.bf16.gmra.mxu0 %v758
    %v2011 = vpop.f32.mrf.mxu0
    %v2012 = vadd.f32 %v1923, %v2011
    %v2013 = vpop.f32.mrf.mxu0
    %v2014 = vadd.f32 %v1925, %v2013
    %2015 = vmatmul.bf16.gmra.mxu0 %v766
    %v2016 = vpop.f32.mrf.mxu0
    %v2017 = vadd.f32 %v1928, %v2016
    %v2018 = vpop.f32.mrf.mxu0
    %v2019 = vadd.f32 %v1930, %v2018
    %2020 = vmatmul.bf16.gmra.mxu0 %v774
    %v2021 = vpop.f32.mrf.mxu0
    %v2022 = vadd.f32 %v1933, %v2021
    %v2023 = vpop.f32.mrf.mxu0
    %v2024 = vadd.f32 %v1935, %v2023
    %2025 = vmatmul.bf16.gmra.mxu0 %v782
    %v2026 = vpop.f32.mrf.mxu0
    %v2027 = vadd.f32 %v1938, %v2026
    %v2028 = vpop.f32.mrf.mxu0
    %v2029 = vadd.f32 %v1940, %v2028
    %2030 = vmatmul.bf16.gmra.mxu0 %v790
    %v2031 = vpop.f32.mrf.mxu0
    %v2032 = vadd.f32 %v1943, %v2031
    %v2033 = vpop.f32.mrf.mxu0
    %v2034 = vadd.f32 %v1945, %v2033
    %2035 = vmatmul.bf16.gmra.mxu0 %v798
    %v2036 = vpop.f32.mrf.mxu0
    %v2037 = vadd.f32 %v1948, %v2036
    %v2038 = vpop.f32.mrf.mxu0
    %v2039 = vadd.f32 %v1950, %v2038
    %2040 = vmatmul.bf16.gmra.mxu0 %v806
    %v2041 = vpop.f32.mrf.mxu0
    %v2042 = vadd.f32 %v1953, %v2041
    %v2043 = vpop.f32.mrf.mxu0
    %v2044 = vadd.f32 %v1955, %v2043
    %2045 = vmatmul.bf16.gmra.mxu0 %v814
    %v2046 = vpop.f32.mrf.mxu0
    %v2047 = vadd.f32 %v1958, %v2046
    %v2048 = vpop.f32.mrf.mxu0
    %v2049 = vadd.f32 %v1960, %v2048
    %2050 = vmatmul.bf16.gmra.mxu0 %v822
    %v2051 = vpop.f32.mrf.mxu0
    %v2052 = vadd.f32 %v1963, %v2051
    %v2053 = vpop.f32.mrf.mxu0
    %v2054 = vadd.f32 %v1965, %v2053
    %2055 = vmatmul.bf16.gmra.mxu0 %v830
    %v2056 = vpop.f32.mrf.mxu0
    %v2057 = vadd.f32 %v1968, %v2056
    %v2058 = vpop.f32.mrf.mxu0
    %v2059 = vadd.f32 %v1970, %v2058
    %2060 = vmatmul.bf16.gmra.mxu0 %v838
    %v2061 = vpop.f32.mrf.mxu0
    %v2062 = vadd.f32 %v1973, %v2061
    %v2063 = vpop.f32.mrf.mxu0
    %v2064 = vadd.f32 %v1975, %v2063
    %2065 = vmatmul.bf16.gmra.mxu0 %v846
    %v2066 = vpop.f32.mrf.mxu0
    %v2067 = vadd.f32 %v1978, %v2066
    %v2068 = vpop.f32.mrf.mxu0
    %v2069 = vadd.f32 %v1980, %v2068
    %2070 = vdwg.mxu0
    %v2071 = vpack.c.bf16 %v1994, %v1992
    %v2072 = vpack.c.bf16 %v1999, %v1997
    %v2073 = vpack.c.bf16 %v2004, %v2002
    %v2074 = vpack.c.bf16 %v2009, %v2007
    %v2075 = vpack.c.bf16 %v2014, %v2012
    %v2076 = vpack.c.bf16 %v2019, %v2017
    %v2077 = vpack.c.bf16 %v2024, %v2022
    %v2078 = vpack.c.bf16 %v2029, %v2027
    %v2079 = vpack.c.bf16 %v2034, %v2032
    %v2080 = vpack.c.bf16 %v2039, %v2037
    %v2081 = vpack.c.bf16 %v2044, %v2042
    %v2082 = vpack.c.bf16 %v2049, %v2047
    %v2083 = vpack.c.bf16 %v2054, %v2052
    %v2084 = vpack.c.bf16 %v2059, %v2057
    %v2085 = vpack.c.bf16 %v2064, %v2062
    %v2086 = vpack.c.bf16 %v2069, %v2067
    %v2087 = vld [vmem:[%s3] sm:$0xf]
    %v2088 = vld [vmem:[%s3 + $0x4] sm:$0xf]
    %v2089 = vld [vmem:[%s3 + $0x8] sm:$0xf]
    %v2090 = vld [vmem:[%s3 + $0xc] sm:$0xf]
    %v2091 = vld [vmem:[%s3 + $0x10] sm:$0xf]
    %v2092 = vld [vmem:[%s3 + $0x14] sm:$0xf]
    %v2093 = vld [vmem:[%s3 + $0x18] sm:$0xf]
    %v2094 = vld [vmem:[%s3 + $0x1c] sm:$0xf]
    %v2103 = vunpack.c.l.b16 %v2087
    %v2104 = vunpack.c.l.b16 %v2088
    %v2105 = vunpack.c.l.b16 %v2089
    %v2106 = vunpack.c.l.b16 %v2090
    %v2107 = vunpack.c.l.b16 %v2091
    %v2108 = vunpack.c.l.b16 %v2092
    %v2109 = vunpack.c.l.b16 %v2093
    %v2110 = vunpack.c.l.b16 %v2094
    %v2111 = vpack.c.b16 %v2104, %v2103
    %v2112 = vpack.c.b16 %v2106, %v2105
    %v2113 = vpack.c.b16 %v2108, %v2107
    %v2114 = vpack.c.b16 %v2110, %v2109
    %vm2119 = vcmask 523264
    %v2121 = vsel %vm2119, %v2071, 0
    %v2124 = vsel %vm2119, %v2072, 0
    %v2127 = vsel %vm2119, %v2073, 0
    %v2130 = vsel %vm2119, %v2074, 0
    %v2133 = vsel %vm2119, %v2075, 0
    %v2136 = vsel %vm2119, %v2076, 0
    %v2139 = vsel %vm2119, %v2077, 0
    %v2142 = vsel %vm2119, %v2078, 0
    %v2145 = vsel %vm2119, %v2079, 0
    %v2148 = vsel %vm2119, %v2080, 0
    %v2151 = vsel %vm2119, %v2081, 0
    %v2154 = vsel %vm2119, %v2082, 0
    %v2157 = vsel %vm2119, %v2083, 0
    %v2160 = vsel %vm2119, %v2084, 0
    %v2163 = vsel %vm2119, %v2085, 0
    %v2166 = vsel %vm2119, %v2086, 0
    %2168 = vmatpush.bf16.msra.mxu0 0
    %2169 = vmatpush.bf16.msra.mxu0 0
    %2170 = vmatpush.bf16.msra.mxu0 0
    %2171 = vmatpush.bf16.msra.mxu0 0
    %2172 = vmatpush.bf16.msra.mxu0 %v2114
    %2173 = vmatpush.bf16.msra.mxu0 %v2113
    %2174 = vmatpush.bf16.msra.mxu0 %v2112
    %2175 = vmatpush.bf16.msra.mxu0 %v2111
    %2176 = vmatmul.bf16.gmra.mxu0 %v2121
    %v2177 = vpop.f32.mrf.mxu0
    %v2178 = vadd.f32 0.0, %v2177
    %v2179 = vpop.f32.mrf.mxu0
    %v2180 = vadd.f32 0.0, %v2179
    %2181 = vmatmul.bf16.gmra.mxu0 %v2124
    %v2182 = vpop.f32.mrf.mxu0
    %v2183 = vadd.f32 0.0, %v2182
    %v2184 = vpop.f32.mrf.mxu0
    %v2185 = vadd.f32 0.0, %v2184
    %2186 = vmatmul.bf16.gmra.mxu0 %v2127
    %v2187 = vpop.f32.mrf.mxu0
    %v2188 = vadd.f32 0.0, %v2187
    %v2189 = vpop.f32.mrf.mxu0
    %v2190 = vadd.f32 0.0, %v2189
    %2191 = vmatmul.bf16.gmra.mxu0 %v2130
    %v2192 = vpop.f32.mrf.mxu0
    %v2193 = vadd.f32 0.0, %v2192
    %v2194 = vpop.f32.mrf.mxu0
    %v2195 = vadd.f32 0.0, %v2194
    %2196 = vmatmul.bf16.gmra.mxu0 %v2133
    %v2197 = vpop.f32.mrf.mxu0
    %v2198 = vadd.f32 0.0, %v2197
    %v2199 = vpop.f32.mrf.mxu0
    %v2200 = vadd.f32 0.0, %v2199
    %2201 = vmatmul.bf16.gmra.mxu0 %v2136
    %v2202 = vpop.f32.mrf.mxu0
    %v2203 = vadd.f32 0.0, %v2202
    %v2204 = vpop.f32.mrf.mxu0
    %v2205 = vadd.f32 0.0, %v2204
    %2206 = vmatmul.bf16.gmra.mxu0 %v2139
    %v2207 = vpop.f32.mrf.mxu0
    %v2208 = vadd.f32 0.0, %v2207
    %v2209 = vpop.f32.mrf.mxu0
    %v2210 = vadd.f32 0.0, %v2209
    %2211 = vmatmul.bf16.gmra.mxu0 %v2142
    %v2212 = vpop.f32.mrf.mxu0
    %v2213 = vadd.f32 0.0, %v2212
    %v2214 = vpop.f32.mrf.mxu0
    %v2215 = vadd.f32 0.0, %v2214
    %2216 = vmatmul.bf16.gmra.mxu0 %v2145
    %v2217 = vpop.f32.mrf.mxu0
    %v2218 = vadd.f32 0.0, %v2217
    %v2219 = vpop.f32.mrf.mxu0
    %v2220 = vadd.f32 0.0, %v2219
    %2221 = vmatmul.bf16.gmra.mxu0 %v2148
    %v2222 = vpop.f32.mrf.mxu0
    %v2223 = vadd.f32 0.0, %v2222
    %v2224 = vpop.f32.mrf.mxu0
    %v2225 = vadd.f32 0.0, %v2224
    %2226 = vmatmul.bf16.gmra.mxu0 %v2151
    %v2227 = vpop.f32.mrf.mxu0
    %v2228 = vadd.f32 0.0, %v2227
    %v2229 = vpop.f32.mrf.mxu0
    %v2230 = vadd.f32 0.0, %v2229
    %2231 = vmatmul.bf16.gmra.mxu0 %v2154
    %v2232 = vpop.f32.mrf.mxu0
    %v2233 = vadd.f32 0.0, %v2232
    %v2234 = vpop.f32.mrf.mxu0
    %v2235 = vadd.f32 0.0, %v2234
    %2236 = vmatmul.bf16.gmra.mxu0 %v2157
    %v2237 = vpop.f32.mrf.mxu0
    %v2238 = vadd.f32 0.0, %v2237
    %v2239 = vpop.f32.mrf.mxu0
    %v2240 = vadd.f32 0.0, %v2239
    %2241 = vmatmul.bf16.gmra.mxu0 %v2160
    %v2242 = vpop.f32.mrf.mxu0
    %v2243 = vadd.f32 0.0, %v2242
    %v2244 = vpop.f32.mrf.mxu0
    %v2245 = vadd.f32 0.0, %v2244
    %2246 = vmatmul.bf16.gmra.mxu0 %v2163
    %v2247 = vpop.f32.mrf.mxu0
    %v2248 = vadd.f32 0.0, %v2247
    %v2249 = vpop.f32.mrf.mxu0
    %v2250 = vadd.f32 0.0, %v2249
    %2251 = vmatmul.bf16.gmra.mxu0 %v2166
    %v2252 = vpop.f32.mrf.mxu0
    %v2253 = vadd.f32 0.0, %v2252
    %v2254 = vpop.f32.mrf.mxu0
    %v2255 = vadd.f32 0.0, %v2254
    %2256 = vdwg.mxu0
    %v2289 = vunpack.c.l.b16 %v31
    %v2290 = vunpack.c.l.b16 %v32
    %v2291 = vunpack.c.l.b16 %v33
    %v2292 = vunpack.c.l.b16 %v34
    %v2293 = vunpack.c.l.b16 %v35
    %v2294 = vunpack.c.l.b16 %v36
    %v2295 = vunpack.c.l.b16 %v37
    %v2296 = vunpack.c.l.b16 %v38
    %v2297 = vunpack.c.l.b16 %v39
    %v2298 = vunpack.c.l.b16 %v40
    %v2299 = vunpack.c.l.b16 %v41
    %v2300 = vunpack.c.l.b16 %v42
    %v2301 = vunpack.c.l.b16 %v43
    %v2302 = vunpack.c.l.b16 %v44
    %v2303 = vunpack.c.l.b16 %v45
    %v2304 = vunpack.c.l.b16 %v46
    %v2305 = vunpack.c.l.b16 %v47
    %v2306 = vunpack.c.l.b16 %v48
    %v2307 = vunpack.c.l.b16 %v49
    %v2308 = vunpack.c.l.b16 %v50
    %v2309 = vunpack.c.l.b16 %v51
    %v2310 = vunpack.c.l.b16 %v52
    %v2311 = vunpack.c.l.b16 %v53
    %v2312 = vunpack.c.l.b16 %v54
    %v2313 = vunpack.c.l.b16 %v55
    %v2314 = vunpack.c.l.b16 %v56
    %v2315 = vunpack.c.l.b16 %v57
    %v2316 = vunpack.c.l.b16 %v58
    %v2317 = vunpack.c.l.b16 %v59
    %v2318 = vunpack.c.l.b16 %v60
    %v2319 = vunpack.c.l.b16 %v61
    %v2320 = vunpack.c.l.b16 %v62
    %v2321 = vpack.c.b16 %v2290, %v2289
    %v2322 = vpack.c.b16 %v2292, %v2291
    %v2323 = vpack.c.b16 %v2294, %v2293
    %v2324 = vpack.c.b16 %v2296, %v2295
    %v2325 = vpack.c.b16 %v2298, %v2297
    %v2326 = vpack.c.b16 %v2300, %v2299
    %v2327 = vpack.c.b16 %v2302, %v2301
    %v2328 = vpack.c.b16 %v2304, %v2303
    %v2329 = vpack.c.b16 %v2306, %v2305
    %v2330 = vpack.c.b16 %v2308, %v2307
    %v2331 = vpack.c.b16 %v2310, %v2309
    %v2332 = vpack.c.b16 %v2312, %v2311
    %v2333 = vpack.c.b16 %v2314, %v2313
    %v2334 = vpack.c.b16 %v2316, %v2315
    %v2335 = vpack.c.b16 %v2318, %v2317
    %v2336 = vpack.c.b16 %v2320, %v2319
    %v2369 = vunpack.c.l.b16 %v63
    %v2370 = vunpack.c.l.b16 %v64
    %v2371 = vunpack.c.l.b16 %v65
    %v2372 = vunpack.c.l.b16 %v66
    %v2373 = vunpack.c.l.b16 %v67
    %v2374 = vunpack.c.l.b16 %v68
    %v2375 = vunpack.c.l.b16 %v69
    %v2376 = vunpack.c.l.b16 %v70
    %v2377 = vunpack.c.l.b16 %v71
    %v2378 = vunpack.c.l.b16 %v72
    %v2379 = vunpack.c.l.b16 %v73
    %v2380 = vunpack.c.l.b16 %v74
    %v2381 = vunpack.c.l.b16 %v75
    %v2382 = vunpack.c.l.b16 %v76
    %v2383 = vunpack.c.l.b16 %v77
    %v2384 = vunpack.c.l.b16 %v78
    %v2385 = vpack.c.b16 %v2370, %v2369
    %v2386 = vpack.c.b16 %v2372, %v2371
    %v2387 = vpack.c.b16 %v2374, %v2373
    %v2388 = vpack.c.b16 %v2376, %v2375
    %v2389 = vpack.c.b16 %v2378, %v2377
    %v2390 = vpack.c.b16 %v2380, %v2379
    %v2391 = vpack.c.b16 %v2382, %v2381
    %v2392 = vpack.c.b16 %v2384, %v2383
    %2401 = vmatpush.bf16.msra.mxu0 %v2392
    %2402 = vmatpush.bf16.msra.mxu0 %v2391
    %2403 = vmatpush.bf16.msra.mxu0 %v2390
    %2404 = vmatpush.bf16.msra.mxu0 %v2389
    %2405 = vmatpush.bf16.msra.mxu0 %v2388
    %2406 = vmatpush.bf16.msra.mxu0 %v2387
    %2407 = vmatpush.bf16.msra.mxu0 %v2386
    %2408 = vmatpush.bf16.msra.mxu0 %v2385
    %2409 = vmatmul.bf16.gmra.mxu0 %v2321
    %v2410 = vpop.f32.mrf.mxu0
    %v2411 = vadd.f32 %v2178, %v2410
    %v2412 = vpop.f32.mrf.mxu0
    %v2413 = vadd.f32 %v2180, %v2412
    %2414 = vmatmul.bf16.gmra.mxu0 %v2322
    %v2415 = vpop.f32.mrf.mxu0
    %v2416 = vadd.f32 %v2183, %v2415
    %v2417 = vpop.f32.mrf.mxu0
    %v2418 = vadd.f32 %v2185, %v2417
    %2419 = vmatmul.bf16.gmra.mxu0 %v2323
    %v2420 = vpop.f32.mrf.mxu0
    %v2421 = vadd.f32 %v2188, %v2420
    %v2422 = vpop.f32.mrf.mxu0
    %v2423 = vadd.f32 %v2190, %v2422
    %2424 = vmatmul.bf16.gmra.mxu0 %v2324
    %v2425 = vpop.f32.mrf.mxu0
    %v2426 = vadd.f32 %v2193, %v2425
    %v2427 = vpop.f32.mrf.mxu0
    %v2428 = vadd.f32 %v2195, %v2427
    %2429 = vmatmul.bf16.gmra.mxu0 %v2325
    %v2430 = vpop.f32.mrf.mxu0
    %v2431 = vadd.f32 %v2198, %v2430
    %v2432 = vpop.f32.mrf.mxu0
    %v2433 = vadd.f32 %v2200, %v2432
    %2434 = vmatmul.bf16.gmra.mxu0 %v2326
    %v2435 = vpop.f32.mrf.mxu0
    %v2436 = vadd.f32 %v2203, %v2435
    %v2437 = vpop.f32.mrf.mxu0
    %v2438 = vadd.f32 %v2205, %v2437
    %2439 = vmatmul.bf16.gmra.mxu0 %v2327
    %v2440 = vpop.f32.mrf.mxu0
    %v2441 = vadd.f32 %v2208, %v2440
    %v2442 = vpop.f32.mrf.mxu0
    %v2443 = vadd.f32 %v2210, %v2442
    %2444 = vmatmul.bf16.gmra.mxu0 %v2328
    %v2445 = vpop.f32.mrf.mxu0
    %v2446 = vadd.f32 %v2213, %v2445
    %v2447 = vpop.f32.mrf.mxu0
    %v2448 = vadd.f32 %v2215, %v2447
    %2449 = vmatmul.bf16.gmra.mxu0 %v2329
    %v2450 = vpop.f32.mrf.mxu0
    %v2451 = vadd.f32 %v2218, %v2450
    %v2452 = vpop.f32.mrf.mxu0
    %v2453 = vadd.f32 %v2220, %v2452
    %2454 = vmatmul.bf16.gmra.mxu0 %v2330
    %v2455 = vpop.f32.mrf.mxu0
    %v2456 = vadd.f32 %v2223, %v2455
    %v2457 = vpop.f32.mrf.mxu0
    %v2458 = vadd.f32 %v2225, %v2457
    %2459 = vmatmul.bf16.gmra.mxu0 %v2331
    %v2460 = vpop.f32.mrf.mxu0
    %v2461 = vadd.f32 %v2228, %v2460
    %v2462 = vpop.f32.mrf.mxu0
    %v2463 = vadd.f32 %v2230, %v2462
    %2464 = vmatmul.bf16.gmra.mxu0 %v2332
    %v2465 = vpop.f32.mrf.mxu0
    %v2466 = vadd.f32 %v2233, %v2465
    %v2467 = vpop.f32.mrf.mxu0
    %v2468 = vadd.f32 %v2235, %v2467
    %2469 = vmatmul.bf16.gmra.mxu0 %v2333
    %v2470 = vpop.f32.mrf.mxu0
    %v2471 = vadd.f32 %v2238, %v2470
    %v2472 = vpop.f32.mrf.mxu0
    %v2473 = vadd.f32 %v2240, %v2472
    %2474 = vmatmul.bf16.gmra.mxu0 %v2334
    %v2475 = vpop.f32.mrf.mxu0
    %v2476 = vadd.f32 %v2243, %v2475
    %v2477 = vpop.f32.mrf.mxu0
    %v2478 = vadd.f32 %v2245, %v2477
    %2479 = vmatmul.bf16.gmra.mxu0 %v2335
    %v2480 = vpop.f32.mrf.mxu0
    %v2481 = vadd.f32 %v2248, %v2480
    %v2482 = vpop.f32.mrf.mxu0
    %v2483 = vadd.f32 %v2250, %v2482
    %2484 = vmatmul.bf16.gmra.mxu0 %v2336
    %v2485 = vpop.f32.mrf.mxu0
    %v2486 = vadd.f32 %v2253, %v2485
    %v2487 = vpop.f32.mrf.mxu0
    %v2488 = vadd.f32 %v2255, %v2487
    %2489 = vdwg.mxu0
    %v2490 = vld [vmem:[%s2] sm:$0xff]
    %v2491 = vld [vmem:[%s2 + $0x8] sm:$0xf]
    %v2492 = vld [vmem:[%s2 + $0xc] sm:$0xff]
    %v2493 = vld [vmem:[%s2 + $0x14] sm:$0xf]
    %v2494 = vld [vmem:[%s2 + $0x18] sm:$0xff]
    %v2495 = vld [vmem:[%s2 + $0x20] sm:$0xf]
    %v2496 = vld [vmem:[%s2 + $0x24] sm:$0xff]
    %v2497 = vld [vmem:[%s2 + $0x2c] sm:$0xf]
    %v2498 = vld [vmem:[%s2 + $0x30] sm:$0xff]
    %v2499 = vld [vmem:[%s2 + $0x38] sm:$0xf]
    %v2500 = vld [vmem:[%s2 + $0x3c] sm:$0xff]
    %v2501 = vld [vmem:[%s2 + $0x44] sm:$0xf]
    %v2502 = vld [vmem:[%s2 + $0x48] sm:$0xff]
    %v2503 = vld [vmem:[%s2 + $0x50] sm:$0xf]
    %v2504 = vld [vmem:[%s2 + $0x54] sm:$0xff]
    %v2505 = vld [vmem:[%s2 + $0x5c] sm:$0xf]
    %v2506 = vld [vmem:[%s5] sm:$0xf]
    %v2507 = vld [vmem:[%s5 + $0x4] sm:$0xf]
    %v2508 = vld [vmem:[%s5 + $0x8] sm:$0xf]
    %v2509 = vld [vmem:[%s5 + $0xc] sm:$0xf]
    %v2510 = vld [vmem:[%s5 + $0x10] sm:$0xf]
    %v2511 = vld [vmem:[%s5 + $0x14] sm:$0xf]
    %v2512 = vld [vmem:[%s5 + $0x18] sm:$0xf]
    %v2513 = vld [vmem:[%s5 + $0x1c] sm:$0xf]
    %v2514 = vld [vmem:[%s5 + $0x20] sm:$0xf]
    %v2515 = vld [vmem:[%s5 + $0x24] sm:$0xf]
    %v2516 = vld [vmem:[%s5 + $0x28] sm:$0xf]
    %v2517 = vld [vmem:[%s5 + $0x2c] sm:$0xf]
    %v2518 = vld [vmem:[%s5 + $0x30] sm:$0xf]
    %v2519 = vld [vmem:[%s5 + $0x34] sm:$0xf]
    %v2520 = vld [vmem:[%s5 + $0x38] sm:$0xf]
    %v2521 = vld [vmem:[%s5 + $0x3c] sm:$0xf]
    %v2522 = vld [vmem:[%s5 + $0x40] sm:$0xf]
    %v2523 = vld [vmem:[%s5 + $0x44] sm:$0xf]
    %v2524 = vld [vmem:[%s5 + $0x48] sm:$0xf]
    %v2525 = vld [vmem:[%s5 + $0x4c] sm:$0xf]
    %v2526 = vld [vmem:[%s5 + $0x50] sm:$0xf]
    %v2527 = vld [vmem:[%s5 + $0x54] sm:$0xf]
    %v2528 = vld [vmem:[%s5 + $0x58] sm:$0xf]
    %v2529 = vld [vmem:[%s5 + $0x5c] sm:$0xf]
    %v2530 = vld [vmem:[%s5 + $0x60] sm:$0xf]
    %v2531 = vld [vmem:[%s5 + $0x64] sm:$0xf]
    %v2532 = vld [vmem:[%s5 + $0x68] sm:$0xf]
    %v2533 = vld [vmem:[%s5 + $0x6c] sm:$0xf]
    %v2534 = vld [vmem:[%s5 + $0x70] sm:$0xf]
    %v2535 = vld [vmem:[%s5 + $0x74] sm:$0xf]
    %v2536 = vld [vmem:[%s5 + $0x78] sm:$0xf]
    %v2537 = vld [vmem:[%s5 + $0x7c] sm:$0xf]
    %v2538 = vld [vmem:[%s5 + $0x80] sm:$0xf]
    %v2539 = vld [vmem:[%s5 + $0x84] sm:$0xf]
    %v2540 = vld [vmem:[%s5 + $0x88] sm:$0xf]
    %v2541 = vld [vmem:[%s5 + $0x8c] sm:$0xf]
    %v2542 = vld [vmem:[%s5 + $0x90] sm:$0xf]
    %v2543 = vld [vmem:[%s5 + $0x94] sm:$0xf]
    %v2544 = vld [vmem:[%s5 + $0x98] sm:$0xf]
    %v2545 = vld [vmem:[%s5 + $0x9c] sm:$0xf]
    %v2562 = vunpack.c.l.b16 %v2490
    %v2563 = vunpack.c.h.b16 %v2490
    %v2564 = vunpack.c.l.b16 %v2491
    %v2565 = vunpack.c.l.b16 %v2492
    %v2566 = vunpack.c.h.b16 %v2492
    %v2567 = vunpack.c.l.b16 %v2493
    %v2568 = vunpack.c.l.b16 %v2494
    %v2569 = vunpack.c.h.b16 %v2494
    %v2570 = vunpack.c.l.b16 %v2495
    %v2571 = vunpack.c.l.b16 %v2496
    %v2572 = vunpack.c.h.b16 %v2496
    %v2573 = vunpack.c.l.b16 %v2497
    %v2574 = vunpack.c.l.b16 %v2498
    %v2575 = vunpack.c.h.b16 %v2498
    %v2576 = vunpack.c.l.b16 %v2499
    %v2577 = vunpack.c.l.b16 %v2500
    %v2578 = vunpack.c.h.b16 %v2500
    %v2579 = vunpack.c.l.b16 %v2501
    %v2580 = vunpack.c.l.b16 %v2502
    %v2581 = vunpack.c.h.b16 %v2502
    %v2582 = vunpack.c.l.b16 %v2503
    %v2583 = vunpack.c.l.b16 %v2504
    %v2584 = vunpack.c.h.b16 %v2504
    %v2585 = vunpack.c.l.b16 %v2505
    %v2586 = vpack.c.b16 %v2565, %v2562
    %v2587 = vpack.c.b16 %v2566, %v2563
    %v2588 = vpack.c.b16 %v2567, %v2564
    %v2589 = vpack.c.b16 %v2571, %v2568
    %v2590 = vpack.c.b16 %v2572, %v2569
    %v2591 = vpack.c.b16 %v2573, %v2570
    %v2592 = vpack.c.b16 %v2577, %v2574
    %v2593 = vpack.c.b16 %v2578, %v2575
    %v2594 = vpack.c.b16 %v2579, %v2576
    %v2595 = vpack.c.b16 %v2583, %v2580
    %v2596 = vpack.c.b16 %v2584, %v2581
    %v2597 = vpack.c.b16 %v2585, %v2582
    %v2646 = vunpack.c.l.b16 %v2506
    %v2647 = vunpack.c.l.b16 %v2507
    %v2648 = vunpack.c.l.b16 %v2508
    %v2649 = vunpack.c.l.b16 %v2509
    %v2650 = vunpack.c.l.b16 %v2510
    %v2651 = vunpack.c.l.b16 %v2511
    %v2652 = vunpack.c.l.b16 %v2512
    %v2653 = vunpack.c.l.b16 %v2513
    %v2654 = vunpack.c.l.b16 %v2514
    %v2655 = vunpack.c.l.b16 %v2515
    %v2656 = vunpack.c.l.b16 %v2516
    %v2657 = vunpack.c.l.b16 %v2517
    %v2658 = vunpack.c.l.b16 %v2518
    %v2659 = vunpack.c.l.b16 %v2519
    %v2660 = vunpack.c.l.b16 %v2520
    %v2661 = vunpack.c.l.b16 %v2521
    %v2662 = vunpack.c.l.b16 %v2522
    %v2663 = vunpack.c.l.b16 %v2523
    %v2664 = vunpack.c.l.b16 %v2524
    %v2665 = vunpack.c.l.b16 %v2525
    %v2666 = vunpack.c.l.b16 %v2526
    %v2667 = vunpack.c.l.b16 %v2527
    %v2668 = vunpack.c.l.b16 %v2528
    %v2669 = vunpack.c.l.b16 %v2529
    %v2670 = vunpack.c.l.b16 %v2530
    %v2671 = vunpack.c.l.b16 %v2531
    %v2672 = vunpack.c.l.b16 %v2532
    %v2673 = vunpack.c.l.b16 %v2533
    %v2674 = vunpack.c.l.b16 %v2534
    %v2675 = vunpack.c.l.b16 %v2535
    %v2676 = vunpack.c.l.b16 %v2536
    %v2677 = vunpack.c.l.b16 %v2537
    %v2678 = vunpack.c.l.b16 %v2538
    %v2679 = vunpack.c.l.b16 %v2539
    %v2680 = vunpack.c.l.b16 %v2540
    %v2681 = vunpack.c.l.b16 %v2541
    %v2682 = vunpack.c.l.b16 %v2542
    %v2683 = vunpack.c.l.b16 %v2543
    %v2684 = vunpack.c.l.b16 %v2544
    %v2685 = vunpack.c.l.b16 %v2545
    %v2686 = vpack.c.b16 %v2647, %v2646
    %v2687 = vpack.c.b16 %v2649, %v2648
    %v2688 = vpack.c.b16 %v2651, %v2650
    %v2689 = vpack.c.b16 %v2653, %v2652
    %v2690 = vpack.c.b16 %v2655, %v2654
    %v2691 = vpack.c.b16 %v2657, %v2656
    %v2692 = vpack.c.b16 %v2659, %v2658
    %v2693 = vpack.c.b16 %v2661, %v2660
    %v2694 = vpack.c.b16 %v2663, %v2662
    %v2695 = vpack.c.b16 %v2665, %v2664
    %v2696 = vpack.c.b16 %v2667, %v2666
    %v2697 = vpack.c.b16 %v2669, %v2668
    %v2698 = vpack.c.b16 %v2671, %v2670
    %v2699 = vpack.c.b16 %v2673, %v2672
    %v2700 = vpack.c.b16 %v2675, %v2674
    %v2701 = vpack.c.b16 %v2677, %v2676
    %v2702 = vpack.c.b16 %v2679, %v2678
    %v2703 = vpack.c.b16 %v2681, %v2680
    %v2704 = vpack.c.b16 %v2683, %v2682
    %v2705 = vpack.c.b16 %v2685, %v2684
    %v2727 = vsel %vm2119, %v2588, 0
    %v2730 = vsel %vm2119, %v2591, 0
    %v2733 = vsel %vm2119, %v2594, 0
    %v2736 = vsel %vm2119, %v2597, 0
    %2738 = vmatpush.bf16.msra.mxu0 %v2693
    %2739 = vmatpush.bf16.msra.mxu0 %v2692
    %2740 = vmatpush.bf16.msra.mxu0 %v2691
    %2741 = vmatpush.bf16.msra.mxu0 %v2690
    %2742 = vmatpush.bf16.msra.mxu0 %v2689
    %2743 = vmatpush.bf16.msra.mxu0 %v2688
    %2744 = vmatpush.bf16.msra.mxu0 %v2687
    %2745 = vmatpush.bf16.msra.mxu0 %v2686
    %2746 = vmatmul.bf16.gmra.mxu0 %v2586
    %v2747 = vpop.f32.mrf.mxu0
    %v2748 = vadd.f32 0.0, %v2747
    %v2749 = vpop.f32.mrf.mxu0
    %v2750 = vadd.f32 0.0, %v2749
    %2751 = vmatmul.bf16.gmra.mxu0 %v2589
    %v2752 = vpop.f32.mrf.mxu0
    %v2753 = vadd.f32 0.0, %v2752
    %v2754 = vpop.f32.mrf.mxu0
    %v2755 = vadd.f32 0.0, %v2754
    %2756 = vmatmul.bf16.gmra.mxu0 %v2592
    %v2757 = vpop.f32.mrf.mxu0
    %v2758 = vadd.f32 0.0, %v2757
    %v2759 = vpop.f32.mrf.mxu0
    %v2760 = vadd.f32 0.0, %v2759
    %2761 = vmatmul.bf16.gmra.mxu0 %v2595
    %v2762 = vpop.f32.mrf.mxu0
    %v2763 = vadd.f32 0.0, %v2762
    %v2764 = vpop.f32.mrf.mxu0
    %v2765 = vadd.f32 0.0, %v2764
    %2766 = vdwg.mxu0
    %2767 = vmatpush.bf16.msra.mxu0 %v2701
    %2768 = vmatpush.bf16.msra.mxu0 %v2700
    %2769 = vmatpush.bf16.msra.mxu0 %v2699
    %2770 = vmatpush.bf16.msra.mxu0 %v2698
    %2771 = vmatpush.bf16.msra.mxu0 %v2697
    %2772 = vmatpush.bf16.msra.mxu0 %v2696
    %2773 = vmatpush.bf16.msra.mxu0 %v2695
    %2774 = vmatpush.bf16.msra.mxu0 %v2694
    %2775 = vmatmul.bf16.gmra.mxu0 %v2587
    %v2776 = vpop.f32.mrf.mxu0
    %v2777 = vadd.f32 %v2748, %v2776
    %v2778 = vpop.f32.mrf.mxu0
    %v2779 = vadd.f32 %v2750, %v2778
    %2780 = vmatmul.bf16.gmra.mxu0 %v2590
    %v2781 = vpop.f32.mrf.mxu0
    %v2782 = vadd.f32 %v2753, %v2781
    %v2783 = vpop.f32.mrf.mxu0
    %v2784 = vadd.f32 %v2755, %v2783
    %2785 = vmatmul.bf16.gmra.mxu0 %v2593
    %v2786 = vpop.f32.mrf.mxu0
    %v2787 = vadd.f32 %v2758, %v2786
    %v2788 = vpop.f32.mrf.mxu0
    %v2789 = vadd.f32 %v2760, %v2788
    %2790 = vmatmul.bf16.gmra.mxu0 %v2596
    %v2791 = vpop.f32.mrf.mxu0
    %v2792 = vadd.f32 %v2763, %v2791
    %v2793 = vpop.f32.mrf.mxu0
    %v2794 = vadd.f32 %v2765, %v2793
    %2795 = vdwg.mxu0
    %2796 = vmatpush.bf16.msra.mxu0 0
    %2797 = vmatpush.bf16.msra.mxu0 0
    %2798 = vmatpush.bf16.msra.mxu0 0
    %2799 = vmatpush.bf16.msra.mxu0 0
    %2800 = vmatpush.bf16.msra.mxu0 %v2705
    %2801 = vmatpush.bf16.msra.mxu0 %v2704
    %2802 = vmatpush.bf16.msra.mxu0 %v2703
    %2803 = vmatpush.bf16.msra.mxu0 %v2702
    %2804 = vmatmul.bf16.gmra.mxu0 %v2727
    %v2805 = vpop.f32.mrf.mxu0
    %v2806 = vadd.f32 %v2777, %v2805
    %v2807 = vpop.f32.mrf.mxu0
    %v2808 = vadd.f32 %v2779, %v2807
    %2809 = vmatmul.bf16.gmra.mxu0 %v2730
    %v2810 = vpop.f32.mrf.mxu0
    %v2811 = vadd.f32 %v2782, %v2810
    %v2812 = vpop.f32.mrf.mxu0
    %v2813 = vadd.f32 %v2784, %v2812
    %2814 = vmatmul.bf16.gmra.mxu0 %v2733
    %v2815 = vpop.f32.mrf.mxu0
    %v2816 = vadd.f32 %v2787, %v2815
    %v2817 = vpop.f32.mrf.mxu0
    %v2818 = vadd.f32 %v2789, %v2817
    %2819 = vmatmul.bf16.gmra.mxu0 %v2736
    %v2820 = vpop.f32.mrf.mxu0
    %v2821 = vadd.f32 %v2792, %v2820
    %v2822 = vpop.f32.mrf.mxu0
    %v2823 = vadd.f32 %v2794, %v2822
    %2824 = vdwg.mxu0
    %v2825 = vpack.c.bf16 %v2808, %v2806
    %v2826 = vpack.c.bf16 %v2813, %v2811
    %v2827 = vpack.c.bf16 %v2818, %v2816
    %v2828 = vpack.c.bf16 %v2823, %v2821
    %v2829 = vld [vmem:[%s7] sm:$0xf]
    %v2830 = vld [vmem:[%s7 + $0x4] sm:$0xf]
    %v2831 = vld [vmem:[%s7 + $0x8] sm:$0xf]
    %v2832 = vld [vmem:[%s7 + $0xc] sm:$0xf]
    %v2833 = vld [vmem:[%s7 + $0x10] sm:$0xf]
    %v2834 = vld [vmem:[%s7 + $0x14] sm:$0xf]
    %v2835 = vld [vmem:[%s7 + $0x18] sm:$0xf]
    %v2836 = vld [vmem:[%s7 + $0x1c] sm:$0xf]
    %v2837 = vld [vmem:[%s7 + $0x20] sm:$0xf]
    %v2838 = vld [vmem:[%s7 + $0x24] sm:$0xf]
    %v2839 = vld [vmem:[%s7 + $0x28] sm:$0xf]
    %v2840 = vld [vmem:[%s7 + $0x2c] sm:$0xf]
    %v2841 = vld [vmem:[%s7 + $0x30] sm:$0xf]
    %v2842 = vld [vmem:[%s7 + $0x34] sm:$0xf]
    %v2843 = vld [vmem:[%s7 + $0x38] sm:$0xf]
    %v2844 = vld [vmem:[%s7 + $0x3c] sm:$0xf]
    %v2845 = vld [vmem:[%s7 + $0x40] sm:$0xf]
    %v2846 = vld [vmem:[%s7 + $0x44] sm:$0xf]
    %v2847 = vld [vmem:[%s7 + $0x48] sm:$0xf]
    %v2848 = vld [vmem:[%s7 + $0x4c] sm:$0xf]
    %v2849 = vld [vmem:[%s7 + $0x50] sm:$0xf]
    %v2850 = vld [vmem:[%s7 + $0x54] sm:$0xf]
    %v2851 = vld [vmem:[%s7 + $0x58] sm:$0xf]
    %v2852 = vld [vmem:[%s7 + $0x5c] sm:$0xf]
    %v2853 = vld [vmem:[%s7 + $0x60] sm:$0xf]
    %v2854 = vld [vmem:[%s7 + $0x64] sm:$0xf]
    %v2855 = vld [vmem:[%s7 + $0x68] sm:$0xf]
    %v2856 = vld [vmem:[%s7 + $0x6c] sm:$0xf]
    %v2857 = vld [vmem:[%s7 + $0x70] sm:$0xf]
    %v2858 = vld [vmem:[%s7 + $0x74] sm:$0xf]
    %v2859 = vld [vmem:[%s7 + $0x78] sm:$0xf]
    %v2860 = vld [vmem:[%s7 + $0x7c] sm:$0xf]
    %v2893 = vunpack.c.l.b16 %v2829
    %v2894 = vunpack.c.l.b16 %v2830
    %v2895 = vunpack.c.l.b16 %v2831
    %v2896 = vunpack.c.l.b16 %v2832
    %v2897 = vunpack.c.l.b16 %v2833
    %v2898 = vunpack.c.l.b16 %v2834
    %v2899 = vunpack.c.l.b16 %v2835
    %v2900 = vunpack.c.l.b16 %v2836
    %v2901 = vunpack.c.l.b16 %v2837
    %v2902 = vunpack.c.l.b16 %v2838
    %v2903 = vunpack.c.l.b16 %v2839
    %v2904 = vunpack.c.l.b16 %v2840
    %v2905 = vunpack.c.l.b16 %v2841
    %v2906 = vunpack.c.l.b16 %v2842
    %v2907 = vunpack.c.l.b16 %v2843
    %v2908 = vunpack.c.l.b16 %v2844
    %v2909 = vunpack.c.l.b16 %v2845
    %v2910 = vunpack.c.l.b16 %v2846
    %v2911 = vunpack.c.l.b16 %v2847
    %v2912 = vunpack.c.l.b16 %v2848
    %v2913 = vunpack.c.l.b16 %v2849
    %v2914 = vunpack.c.l.b16 %v2850
    %v2915 = vunpack.c.l.b16 %v2851
    %v2916 = vunpack.c.l.b16 %v2852
    %v2917 = vunpack.c.l.b16 %v2853
    %v2918 = vunpack.c.l.b16 %v2854
    %v2919 = vunpack.c.l.b16 %v2855
    %v2920 = vunpack.c.l.b16 %v2856
    %v2921 = vunpack.c.l.b16 %v2857
    %v2922 = vunpack.c.l.b16 %v2858
    %v2923 = vunpack.c.l.b16 %v2859
    %v2924 = vunpack.c.l.b16 %v2860
    %v2925 = vpack.c.b16 %v2894, %v2893
    %v2926 = vpack.c.b16 %v2896, %v2895
    %v2927 = vpack.c.b16 %v2898, %v2897
    %v2928 = vpack.c.b16 %v2900, %v2899
    %v2929 = vpack.c.b16 %v2902, %v2901
    %v2930 = vpack.c.b16 %v2904, %v2903
    %v2931 = vpack.c.b16 %v2906, %v2905
    %v2932 = vpack.c.b16 %v2908, %v2907
    %v2933 = vpack.c.b16 %v2910, %v2909
    %v2934 = vpack.c.b16 %v2912, %v2911
    %v2935 = vpack.c.b16 %v2914, %v2913
    %v2936 = vpack.c.b16 %v2916, %v2915
    %v2937 = vpack.c.b16 %v2918, %v2917
    %v2938 = vpack.c.b16 %v2920, %v2919
    %v2939 = vpack.c.b16 %v2922, %v2921
    %v2940 = vpack.c.b16 %v2924, %v2923
    %v2942 = vsel %vm2119, %v2925, 0
    %v2945 = vsel %vm2119, %v2926, 0
    %v2948 = vsel %vm2119, %v2927, 0
    %v2951 = vsel %vm2119, %v2928, 0
    %v2954 = vsel %vm2119, %v2929, 0
    %v2957 = vsel %vm2119, %v2930, 0
    %v2960 = vsel %vm2119, %v2931, 0
    %v2963 = vsel %vm2119, %v2932, 0
    %v2966 = vsel %vm2119, %v2933, 0
    %v2969 = vsel %vm2119, %v2934, 0
    %v2972 = vsel %vm2119, %v2935, 0
    %v2975 = vsel %vm2119, %v2936, 0
    %v2978 = vsel %vm2119, %v2937, 0
    %v2981 = vsel %vm2119, %v2938, 0
    %v2984 = vsel %vm2119, %v2939, 0
    %v2987 = vsel %vm2119, %v2940, 0
    %2989 = vmatpush.bf16.msra.mxu0 0
    %2990 = vmatpush.bf16.msra.mxu0 0
    %2991 = vmatpush.bf16.msra.mxu0 0
    %2992 = vmatpush.bf16.msra.mxu0 0
    %2993 = vmatpush.bf16.msra.mxu0 %v2828
    %2994 = vmatpush.bf16.msra.mxu0 %v2827
    %2995 = vmatpush.bf16.msra.mxu0 %v2826
    %2996 = vmatpush.bf16.msra.mxu0 %v2825
    %2997 = vmatmul.bf16.gmra.mxu0 %v2942
    %v2998 = vpop.f32.mrf.mxu0
    %v2999 = vadd.f32 0.0, %v2998
    %v3000 = vpop.f32.mrf.mxu0
    %v3001 = vadd.f32 0.0, %v3000
    %3002 = vmatmul.bf16.gmra.mxu0 %v2945
    %v3003 = vpop.f32.mrf.mxu0
    %v3004 = vadd.f32 0.0, %v3003
    %v3005 = vpop.f32.mrf.mxu0
    %v3006 = vadd.f32 0.0, %v3005
    %3007 = vmatmul.bf16.gmra.mxu0 %v2948
    %v3008 = vpop.f32.mrf.mxu0
    %v3009 = vadd.f32 0.0, %v3008
    %v3010 = vpop.f32.mrf.mxu0
    %v3011 = vadd.f32 0.0, %v3010
    %3012 = vmatmul.bf16.gmra.mxu0 %v2951
    %v3013 = vpop.f32.mrf.mxu0
    %v3014 = vadd.f32 0.0, %v3013
    %v3015 = vpop.f32.mrf.mxu0
    %v3016 = vadd.f32 0.0, %v3015
    %3017 = vmatmul.bf16.gmra.mxu0 %v2954
    %v3018 = vpop.f32.mrf.mxu0
    %v3019 = vadd.f32 0.0, %v3018
    %v3020 = vpop.f32.mrf.mxu0
    %v3021 = vadd.f32 0.0, %v3020
    %3022 = vmatmul.bf16.gmra.mxu0 %v2957
    %v3023 = vpop.f32.mrf.mxu0
    %v3024 = vadd.f32 0.0, %v3023
    %v3025 = vpop.f32.mrf.mxu0
    %v3026 = vadd.f32 0.0, %v3025
    %3027 = vmatmul.bf16.gmra.mxu0 %v2960
    %v3028 = vpop.f32.mrf.mxu0
    %v3029 = vadd.f32 0.0, %v3028
    %v3030 = vpop.f32.mrf.mxu0
    %v3031 = vadd.f32 0.0, %v3030
    %3032 = vmatmul.bf16.gmra.mxu0 %v2963
    %v3033 = vpop.f32.mrf.mxu0
    %v3034 = vadd.f32 0.0, %v3033
    %v3035 = vpop.f32.mrf.mxu0
    %v3036 = vadd.f32 0.0, %v3035
    %3037 = vmatmul.bf16.gmra.mxu0 %v2966
    %v3038 = vpop.f32.mrf.mxu0
    %v3039 = vadd.f32 0.0, %v3038
    %v3040 = vpop.f32.mrf.mxu0
    %v3041 = vadd.f32 0.0, %v3040
    %3042 = vmatmul.bf16.gmra.mxu0 %v2969
    %v3043 = vpop.f32.mrf.mxu0
    %v3044 = vadd.f32 0.0, %v3043
    %v3045 = vpop.f32.mrf.mxu0
    %v3046 = vadd.f32 0.0, %v3045
    %3047 = vmatmul.bf16.gmra.mxu0 %v2972
    %v3048 = vpop.f32.mrf.mxu0
    %v3049 = vadd.f32 0.0, %v3048
    %v3050 = vpop.f32.mrf.mxu0
    %v3051 = vadd.f32 0.0, %v3050
    %3052 = vmatmul.bf16.gmra.mxu0 %v2975
    %v3053 = vpop.f32.mrf.mxu0
    %v3054 = vadd.f32 0.0, %v3053
    %v3055 = vpop.f32.mrf.mxu0
    %v3056 = vadd.f32 0.0, %v3055
    %3057 = vmatmul.bf16.gmra.mxu0 %v2978
    %v3058 = vpop.f32.mrf.mxu0
    %v3059 = vadd.f32 0.0, %v3058
    %v3060 = vpop.f32.mrf.mxu0
    %v3061 = vadd.f32 0.0, %v3060
    %3062 = vmatmul.bf16.gmra.mxu0 %v2981
    %v3063 = vpop.f32.mrf.mxu0
    %v3064 = vadd.f32 0.0, %v3063
    %v3065 = vpop.f32.mrf.mxu0
    %v3066 = vadd.f32 0.0, %v3065
    %3067 = vmatmul.bf16.gmra.mxu0 %v2984
    %v3068 = vpop.f32.mrf.mxu0
    %v3069 = vadd.f32 0.0, %v3068
    %v3070 = vpop.f32.mrf.mxu0
    %v3071 = vadd.f32 0.0, %v3070
    %3072 = vmatmul.bf16.gmra.mxu0 %v2987
    %v3073 = vpop.f32.mrf.mxu0
    %v3074 = vadd.f32 0.0, %v3073
    %v3075 = vpop.f32.mrf.mxu0
    %v3076 = vadd.f32 0.0, %v3075
    %3077 = vdwg.mxu0
    %v3078 = vadd.f32 %v2411, %v2999
    %v3079 = vadd.f32 %v2413, %v3001
    %v3080 = vadd.f32 %v2416, %v3004
    %v3081 = vadd.f32 %v2418, %v3006
    %v3082 = vadd.f32 %v2421, %v3009
    %v3083 = vadd.f32 %v2423, %v3011
    %v3084 = vadd.f32 %v2426, %v3014
    %v3085 = vadd.f32 %v2428, %v3016
    %v3086 = vadd.f32 %v2431, %v3019
    %v3087 = vadd.f32 %v2433, %v3021
    %v3088 = vadd.f32 %v2436, %v3024
    %v3089 = vadd.f32 %v2438, %v3026
    %v3090 = vadd.f32 %v2441, %v3029
    %v3091 = vadd.f32 %v2443, %v3031
    %v3092 = vadd.f32 %v2446, %v3034
    %v3093 = vadd.f32 %v2448, %v3036
    %v3094 = vadd.f32 %v2451, %v3039
    %v3095 = vadd.f32 %v2453, %v3041
    %v3096 = vadd.f32 %v2456, %v3044
    %v3097 = vadd.f32 %v2458, %v3046
    %v3098 = vadd.f32 %v2461, %v3049
    %v3099 = vadd.f32 %v2463, %v3051
    %v3100 = vadd.f32 %v2466, %v3054
    %v3101 = vadd.f32 %v2468, %v3056
    %v3102 = vadd.f32 %v2471, %v3059
    %v3103 = vadd.f32 %v2473, %v3061
    %v3104 = vadd.f32 %v2476, %v3064
    %v3105 = vadd.f32 %v2478, %v3066
    %v3106 = vadd.f32 %v2481, %v3069
    %v3107 = vadd.f32 %v2483, %v3071
    %v3108 = vadd.f32 %v2486, %v3074
    %v3109 = vadd.f32 %v2488, %v3076
    %3110 = vst [vmem:[#allocation2] sm:$0xff] %v3078
    %3111 = vst [vmem:[#allocation2 + $0x8] sm:$0xff] %v3079
    %3112 = vst [vmem:[#allocation2 + $0x10] sm:$0xff] %v3080
    %3113 = vst [vmem:[#allocation2 + $0x18] sm:$0xff] %v3081
    %3114 = vst [vmem:[#allocation2 + $0x20] sm:$0xff] %v3082
    %3115 = vst [vmem:[#allocation2 + $0x28] sm:$0xff] %v3083
    %3116 = vst [vmem:[#allocation2 + $0x30] sm:$0xff] %v3084
    %3117 = vst [vmem:[#allocation2 + $0x38] sm:$0xff] %v3085
    %3118 = vst [vmem:[#allocation2 + $0x40] sm:$0xff] %v3086
    %3119 = vst [vmem:[#allocation2 + $0x48] sm:$0xff] %v3087
    %3120 = vst [vmem:[#allocation2 + $0x50] sm:$0xff] %v3088
    %3121 = vst [vmem:[#allocation2 + $0x58] sm:$0xff] %v3089
    %3122 = vst [vmem:[#allocation2 + $0x60] sm:$0xff] %v3090
    %3123 = vst [vmem:[#allocation2 + $0x68] sm:$0xff] %v3091
    %3124 = vst [vmem:[#allocation2 + $0x70] sm:$0xff] %v3092
    %3125 = vst [vmem:[#allocation2 + $0x78] sm:$0xff] %v3093
    %3126 = vst [vmem:[#allocation2 + $0x80] sm:$0xff] %v3094
    %3127 = vst [vmem:[#allocation2 + $0x88] sm:$0xff] %v3095
    %3128 = vst [vmem:[#allocation2 + $0x90] sm:$0xff] %v3096
    %3129 = vst [vmem:[#allocation2 + $0x98] sm:$0xff] %v3097
    %3130 = vst [vmem:[#allocation2 + $0xa0] sm:$0xff] %v3098
    %3131 = vst [vmem:[#allocation2 + $0xa8] sm:$0xff] %v3099
    %3132 = vst [vmem:[#allocation2 + $0xb0] sm:$0xff] %v3100
    %3133 = vst [vmem:[#allocation2 + $0xb8] sm:$0xff] %v3101
    %3134 = vst [vmem:[#allocation2 + $0xc0] sm:$0xff] %v3102
    %3135 = vst [vmem:[#allocation2 + $0xc8] sm:$0xff] %v3103
    %3136 = vst [vmem:[#allocation2 + $0xd0] sm:$0xff] %v3104
    %3137 = vst [vmem:[#allocation2 + $0xd8] sm:$0xff] %v3105
    %3138 = vst [vmem:[#allocation2 + $0xe0] sm:$0xff] %v3106
    %3139 = vst [vmem:[#allocation2 + $0xe8] sm:$0xff] %v3107
    %3140 = vst [vmem:[#allocation2 + $0xf0] sm:$0xff] %v3108
    %3141 = vst [vmem:[#allocation2 + $0xf8] sm:$0xff] %v3109
    // Predicated region
    $region34: #{_aux_x_nhwc.1} parent=1 // pred_check
      _
    $region35: #{_aux_x_nhwc.1} parent=1 // pred_check_branch
      %3143 = sbr.rel (0) target = $region37
    $region36: #{_aux_x_nhwc.1} parent=1 // pred_region
      %3145 = vsyncadd [#allocation3], 0
      %s3146 = sshll.u32 [#allocation2], 4
      %s3147 = int_to_ptr.vmem [resolvable:$true] %s3146
      %s3148 = sshll.u32 %s8, 4
      %s3149 = int_to_ptr.hbm [resolvable:$true] %s3148
      %3154 = dma.vmem_to_hbm [thread:$0]  %s3147, 4096, %s3149, [#allocation3], 128, 128, 8
    $region37: #{_aux_x_nhwc.1} parent=1 // pred_fallthru
      _
    // Predicated region
    $region38: #{_aux_x_nhwc.1} parent=1 // pred_check
      _
    $region39: #{_aux_x_nhwc.1} parent=1 // pred_check_branch
      %3156 = sbr.rel (0) target = $region41
    $region40: #{_aux_x_nhwc.1} parent=1 // pred_region
      %3158 = dma.done [#allocation3], 4096
    $region41: #{_aux_x_nhwc.1} parent=1 // pred_fallthru
      _
    %3159 = vsyncpa [#allocation3], 1

</llo_original>
